<compile_context>
chip_gen: v6e
topology: v6e:2x2x1
jax: 0.10.0
libtpu: 0.0.40
codegen_flags: <defaults>
</compile_context>

<pallas_src>
import jax
import jax.numpy as jnp
from jax.experimental import pallas as pl
from jax.experimental.pallas import tpu as pltpu

# ----- model hyper-parameters (small, synthetic) -----
B, S, H = 2, 8, 32
NUM_HEADS = 2
HEAD_DIM = H // NUM_HEADS
INTER = 64
VOCAB = 64
TYPE_VOCAB = 2
MAX_POS = 16
NUM_LAYERS = 2
NUM_ENCODERS = 2          # hr_bert, tail_bert
NUM_SEGMENTS = 3          # hr, tail, head
LN_EPS = 1e-12
POOLING = "mean"          # SimKGC default pooling mode
# TODO(synk): only 'mean' pooling implemented; 'cls'/'max' branches of
# _pool_output are not exercised here.

VMEM_SPACE = pltpu.MemorySpace.VMEM


def _layernorm(x, g, b):
    mu = jnp.mean(x, axis=-1, keepdims=True)
    var = jnp.mean((x - mu) ** 2, axis=-1, keepdims=True)
    return (x - mu) * jax.lax.rsqrt(var + LN_EPS) * g + b


# ---------------------------------------------------------------------------
# Fused encoder kernel: grid = (segment, layer)
# ---------------------------------------------------------------------------
def encoder_kernel(enc_ref,                                   # scalar prefetch (unused in body)
                   emb_ref, am_ref, m_ref, embln_ref,
                   wqkv_ref, bqkv_ref, wo_ref, wi_ref, bi_ref, w2_ref, vecs_ref,
                   o_ref, x_scr):
    """One (segment, layer) grid step of the BERT encoder.

    emb_ref : (B, S, H)   summed token+pos+type embeddings for this segment
    am_ref  : (B, 1, S)   additive attention mask ((1-mask)*-10000)
    m_ref   : (B, S, 1)   float attention mask for mean pooling
    embln_ref: (2, H)     embedding LayerNorm gamma/beta (this segment's encoder)
    wqkv_ref: (H, 3H) bf16   fused Q/K/V weights    bqkv_ref: (1, 3H) f32
    wo_ref  : (H, H)  bf16   attention output weights
    wi_ref  : (H, I)  bf16   FFN in                 bi_ref : (1, I)  f32
    w2_ref  : (I, H)  bf16   FFN out
    vecs_ref: (6, H)  f32    [b_o, ln1_g, ln1_b, ffn_b2, ln2_g, ln2_b]
    o_ref   : (B, H)  f32    pooled + L2-normalized output vector
    x_scr   : (B*S, H) f32   resident activation slab (persists across layers)
    """
    del enc_ref  # only used by the index_maps
    l = pl.program_id(1)
    n_layers = pl.num_programs(1)
    Bn, Sn, Hn = emb_ref.shape
    BS = Bn * Sn
    scale = 1.0 / (HEAD_DIM ** 0.5)

    # --- layer 0: embedding LayerNorm initializes the resident slab ---
    @pl.when(l == 0)
    def _():
        x_scr[...] = _layernorm(emb_ref[...].reshape(BS, Hn),
                                embln_ref[0:1], embln_ref[1:2])

    x2 = x_scr[...]                                   # (BS, H) f32
    am = am_ref[...]                                  # (B, 1, S) f32

    vec = vecs_ref[...]                               # (6, H)
    bo, g1, b1 = vec[0:1], vec[1:2], vec[2:3]
    b2v, g2, b2b = vec[3:4], vec[4:5], vec[5:6]

    # fused QKV projection: one (BS, H) x (H, 3H) bf16 MXU matmul, f32 accum
    qkv = jnp.dot(x2.astype(jnp.bfloat16), wqkv_ref[...],
                  preferred_element_type=jnp.float32) + bqkv_ref[...]

    # per-head attention (short static loop, single-batch-dim einsums),
    # contexts concatenated so the output projection is ONE full-K matmul.
    ctxs = []
    for h in range(NUM_HEADS):
        lo = h * HEAD_DIM
        qh = qkv[:, lo:lo + HEAD_DIM].reshape(Bn, Sn, HEAD_DIM).astype(jnp.bfloat16)
        kh = qkv[:, Hn + lo:Hn + lo + HEAD_DIM].reshape(Bn, Sn, HEAD_DIM).astype(jnp.bfloat16)
        vh = qkv[:, 2 * Hn + lo:2 * Hn + lo + HEAD_DIM].reshape(Bn, Sn, HEAD_DIM).astype(jnp.bfloat16)

        s = jnp.einsum('bqd,bkd->bqk', qh, kh,
                       preferred_element_type=jnp.float32) * scale + am      # (B,S,S) f32
        s = s - jnp.max(s, axis=-1, keepdims=True)
        p = jnp.exp(s)
        p = p * pl.reciprocal(jnp.sum(p, axis=-1, keepdims=True), approx=True)
        ctxs.append(jnp.einsum('bqk,bkd->bqd', p.astype(jnp.bfloat16), vh,
                               preferred_element_type=jnp.float32))          # (B,S,HD)
    ctx = jnp.concatenate(ctxs, axis=-1).reshape(BS, Hn)                     # (BS, H)
    attn = jnp.dot(ctx.astype(jnp.bfloat16), wo_ref[...],
                   preferred_element_type=jnp.float32) + bo

    x1 = _layernorm(x2 + attn, g1, b1)

    hmid = jnp.dot(x1.astype(jnp.bfloat16), wi_ref[...],
                   preferred_element_type=jnp.float32) + bi_ref[...]
    # TODO(synk): HF BERT default hidden_act is exact erf-GELU; tanh-GELU is
    # used here for guaranteed Mosaic lowering (small systematic deviation).
    hmid = jax.nn.gelu(hmid, approximate=True)
    ff = jnp.dot(hmid.astype(jnp.bfloat16), w2_ref[...],
                 preferred_element_type=jnp.float32) + b2v
    x2_new = _layernorm(x1 + ff, g2, b2b)
    x_scr[...] = x2_new

    # --- last layer: masked mean pool + L2 normalize (_pool_output 'mean') ---
    @pl.when(l == n_layers - 1)
    def _():
        h_last = x2_new.reshape(Bn, Sn, Hn)
        m = m_ref[...]                                            # (B, S, 1)
        summ = jnp.sum(h_last * m, axis=1)                        # (B, H)
        denom = jnp.maximum(jnp.sum(m, axis=1), 1e-4)             # clamp(min=0.0001)
        vec_out = summ * pl.reciprocal(denom, approx=True)
        sq = jnp.sum(vec_out * vec_out, axis=-1, keepdims=True)
        # F.normalize(dim=1, eps=1e-12): v / max(||v||, eps) == v * rsqrt(max(||v||^2, eps^2))
        o_ref[...] = vec_out * jax.lax.rsqrt(jnp.maximum(sq, 1e-24))


# ---------------------------------------------------------------------------
# Wrapper: ONE fused pallas_call per forward (all three encodes)
# ---------------------------------------------------------------------------
def _fused_encoder_call(enc_map, emb, am, m3, w, Bn, Sn):
    n_seg = emb.shape[0]

    def seg_spec(shape):
        # per-segment activation operand, same block across the layer axis
        return pl.BlockSpec((None,) + shape,
                            lambda s, l, enc: (s,) + (0,) * len(shape),
                            memory_space=VMEM_SPACE)

    def wgt_spec(shape):
        # per-(encoder, layer) weight tile; encoder picked via scalar prefetch
        return pl.BlockSpec((None, None) + shape,
                            lambda s, l, enc: (enc[s], l) + (0,) * len(shape),
                            memory_space=VMEM_SPACE)

    in_specs = [
        seg_spec((Bn, Sn, H)),                                    # emb
        seg_spec((Bn, 1, Sn)),                                    # additive attn mask
        seg_spec((Bn, Sn, 1)),                                    # pooling mask
        pl.BlockSpec((None, 2, H), lambda s, l, enc: (enc[s], 0, 0),
                     memory_space=VMEM_SPACE),                    # emb LayerNorm
        wgt_spec((H, 3 * H)),                                     # w_qkv (bf16)
        wgt_spec((1, 3 * H)),                                     # b_qkv
        wgt_spec((H, H)),                                         # w_o (bf16)
        wgt_spec((H, INTER)),                                     # w_i (bf16)
        wgt_spec((1, INTER)),                                     # b_i
        wgt_spec((INTER, H)),                                     # w_2 (bf16)
        wgt_spec((6, H)),                                         # merged (1,H) consts
    ]
    out_spec = pl.BlockSpec((None, Bn, H), lambda s, l, enc: (s, 0, 0),
                            memory_space=VMEM_SPACE)

    return pl.pallas_call(
        encoder_kernel,
        out_shape=jax.ShapeDtypeStruct((n_seg, Bn, H), jnp.float32),
        grid_spec=pltpu.PrefetchScalarGridSpec(
            num_scalar_prefetch=1,
            grid=(n_seg, NUM_LAYERS),          # segments parallel, layers sequential
            in_specs=in_specs,
            out_specs=out_spec,
            scratch_shapes=[pltpu.VMEM((Bn * Sn, H), jnp.float32)],  # resident slab
        ),
        compiler_params=pltpu.CompilerParams(
            dimension_semantics=("parallel", "arbitrary"),
            vmem_limit_bytes=64 * 1024 * 1024,
        ),
    )(enc_map, emb, am, m3, w['emb_ln'], w['w_qkv'], w['b_qkv'],
      w['w_o'], w['w_i'], w['b_i'], w['w_2'], w['vecs'])


def custom_bert_forward(hr_params, tail_params,
                        hr_token_ids, hr_mask, hr_token_type_ids,
                        tail_token_ids, tail_mask, tail_token_type_ids,
                        head_token_ids, head_mask, head_token_type_ids):
    """Mirrors CustomBertModel.forward: three encodes -> normalized vectors."""
    Bn, Sn = hr_token_ids.shape

    def embed(p, ids, tt):
        return (jnp.take(p['word_emb'], ids, axis=0)
                + p['pos_emb'][:Sn][None, :, :]
                + jnp.take(p['type_emb'], tt, axis=0))

    # segments: 0 = hr (hr_bert), 1 = tail (tail_bert), 2 = head (tail_bert)
    emb = jnp.stack([embed(hr_params, hr_token_ids, hr_token_type_ids),
                     embed(tail_params, tail_token_ids, tail_token_type_ids),
                     embed(tail_params, head_token_ids, head_token_type_ids)],
                    axis=0)                                                  # (3,B,S,H)
    mask = jnp.stack([hr_mask, tail_mask, head_mask], axis=0).astype(jnp.float32)
    am = ((1.0 - mask) * -10000.0)[:, :, None, :]                            # (3,B,1,S)
    m3 = mask[:, :, :, None]                                                 # (3,B,S,1)

    # stack both encoders' weights on a leading encoder axis (E=2)
    stacked = {k: jnp.stack([hr_params[k], tail_params[k]], axis=0)
               for k in ('emb_ln', 'w_qkv', 'b_qkv', 'w_o', 'w_i', 'b_i', 'w_2', 'vecs')}
    enc_map = jnp.array([0, 1, 1], dtype=jnp.int32)      # segment -> encoder index

    out = _fused_encoder_call(enc_map, emb, am, m3, stacked, Bn, Sn)
    return {'hr_vector': out[0], 'tail_vector': out[1], 'head_vector': out[2]}


# ---------------------------------------------------------------------------
# Parameter init (deterministic, synthetic) — stacked per-layer layout
# ---------------------------------------------------------------------------
def init_bert_params(key):
    keys = jax.random.split(key, 7)

    def nrm(k, shape, dtype=jnp.float32):
        return (0.02 * jax.random.normal(k, shape, jnp.float32)).astype(dtype)

    # merged per-layer (1,H) constants: [b_o, ln1_g, ln1_b, ffn_b2, ln2_g, ln2_b]
    vecs = jnp.zeros((NUM_LAYERS, 6, H), jnp.float32)
    vecs = vecs.at[:, 1, :].set(1.0)   # ln1 gamma
    vecs = vecs.at[:, 4, :].set(1.0)   # ln2 gamma

    return {
        'word_emb': nrm(keys[0], (VOCAB, H)),
        'pos_emb':  nrm(keys[1], (MAX_POS, H)),
        'type_emb': nrm(keys[2], (TYPE_VOCAB, H)),
        'emb_ln':   jnp.stack([jnp.ones((H,), jnp.float32),
                               jnp.zeros((H,), jnp.float32)]),               # (2, H)
        # matmul weights in bf16 (MXU-native on all generations); biases/LN f32
        'w_qkv': nrm(keys[3], (NUM_LAYERS, H, 3 * H), jnp.bfloat16),
        'b_qkv': jnp.zeros((NUM_LAYERS, 1, 3 * H), jnp.float32),
        'w_o':   nrm(keys[4], (NUM_LAYERS, H, H), jnp.bfloat16),
        'w_i':   nrm(keys[5], (NUM_LAYERS, H, INTER), jnp.bfloat16),
        'b_i':   jnp.zeros((NUM_LAYERS, 1, INTER), jnp.float32),
        'w_2':   nrm(keys[6], (NUM_LAYERS, INTER, H), jnp.bfloat16),
        'vecs':  vecs,
    }


# ---------------------------------------------------------------------------
if __name__ == "__main__":
    key = jax.random.PRNGKey(0)
    k_hr, k_ids = jax.random.split(key)

    hr_params = init_bert_params(k_hr)
    # tail_bert = deepcopy(hr_bert) -> identical initial weights
    tail_params = jax.tree_util.tree_map(lambda a: a, hr_params)

    id_keys = jax.random.split(k_ids, 3)

    def make_inputs(k):
        ids = jax.random.randint(k, (B, S), 0, VOCAB, dtype=jnp.int32)
        # mask: first 6 tokens valid, last 2 padded
        mask = jnp.concatenate(
            [jnp.ones((B, 6), jnp.int32), jnp.zeros((B, S - 6), jnp.int32)], axis=1)
        tt = jnp.zeros((B, S), jnp.int32)
        return ids, mask, tt

    hr_ids, hr_mask, hr_tt = make_inputs(id_keys[0])
    t_ids, t_mask, t_tt = make_inputs(id_keys[1])
    h_ids, h_mask, h_tt = make_inputs(id_keys[2])

    fwd = jax.jit(custom_bert_forward)
    out = fwd(hr_params, tail_params,
              hr_ids, hr_mask, hr_tt,
              t_ids, t_mask, t_tt,
              h_ids, h_mask, h_tt)
    jax.block_until_ready(out)

    assert out['hr_vector'].shape == (B, H)
    assert out['tail_vector'].shape == (B, H)
    assert out['head_vector'].shape == (B, H)
    assert bool(jnp.all(jnp.isfinite(out['hr_vector'])))
    assert bool(jnp.all(jnp.isfinite(out['tail_vector'])))
    assert bool(jnp.all(jnp.isfinite(out['head_vector'])))
    print("KERNEL_OK")
</pallas_src>

<mosaic_0001>
module attributes {stable_mosaic.version = 11 : i64} {
  func.func @encoder_kernel(%arg0: i32, %arg1: i32, %arg2: memref<3xi32, #tpu.memory_space<smem>>, %arg3: memref<1x2x8x32xf32, #tpu.memory_space<vmem>>, %arg4: memref<1x2x1x8xf32, #tpu.memory_space<vmem>>, %arg5: memref<1x2x8x1xf32, #tpu.memory_space<vmem>>, %arg6: memref<1x2x32xf32, #tpu.memory_space<vmem>>, %arg7: memref<1x1x32x96xbf16, #tpu.memory_space<vmem>>, %arg8: memref<1x1x1x96xf32, #tpu.memory_space<vmem>>, %arg9: memref<1x1x32x32xbf16, #tpu.memory_space<vmem>>, %arg10: memref<1x1x32x64xbf16, #tpu.memory_space<vmem>>, %arg11: memref<1x1x1x64xf32, #tpu.memory_space<vmem>>, %arg12: memref<1x1x64x32xbf16, #tpu.memory_space<vmem>>, %arg13: memref<1x1x6x32xf32, #tpu.memory_space<vmem>>, %arg14: memref<1x2x32xf32, #tpu.memory_space<vmem>>, %arg15: memref<16x32xf32, #tpu.memory_space<vmem>>) attributes {dimension_semantics = [#tpu.dimension_semantics<parallel>, #tpu.dimension_semantics<arbitrary>], iteration_bounds = array<i64: 3, 2>, scalar_prefetch = 1 : i64, scratch_operands = 1 : i64, tpu.core_type = #tpu.core_type<tc>, window_params = [{transform_indices = @transform_0, window_bounds = array<i64: 1, 2, 8, 32>}, {transform_indices = @transform_1, window_bounds = array<i64: 1, 2, 1, 8>}, {transform_indices = @transform_2, window_bounds = array<i64: 1, 2, 8, 1>}, {transform_indices = @transform_3, window_bounds = array<i64: 1, 2, 32>}, {transform_indices = @transform_4, window_bounds = array<i64: 1, 1, 32, 96>}, {transform_indices = @transform_5, window_bounds = array<i64: 1, 1, 1, 96>}, {transform_indices = @transform_6, window_bounds = array<i64: 1, 1, 32, 32>}, {transform_indices = @transform_7, window_bounds = array<i64: 1, 1, 32, 64>}, {transform_indices = @transform_8, window_bounds = array<i64: 1, 1, 1, 64>}, {transform_indices = @transform_9, window_bounds = array<i64: 1, 1, 64, 32>}, {transform_indices = @transform_10, window_bounds = array<i64: 1, 1, 6, 32>}, {transform_indices = @transform_11, window_bounds = array<i64: 1, 2, 32>}]} {
    %c0_i32 = arith.constant 0 : i32
    %0 = arith.cmpi eq, %arg1, %c0_i32 : i32
    %1 = arith.extui %0 : i1 to i32
    %c0_i32_0 = arith.constant 0 : i32
    %2 = arith.cmpi ne, %1, %c0_i32_0 : i32
    scf.if %2 {
      %c0_64 = arith.constant 0 : index
      %c0_65 = arith.constant 0 : index
      %c0_66 = arith.constant 0 : index
      %c0_67 = arith.constant 0 : index
      %159 = vector.load %arg3[%c0_64, %c0_65, %c0_66, %c0_67] : memref<1x2x8x32xf32, #tpu.memory_space<vmem>>, vector<1x2x8x32xf32>
      %160 = vector.shape_cast %159 : vector<1x2x8x32xf32> to vector<2x8x32xf32>
      %161 = vector.shape_cast %160 : vector<2x8x32xf32> to vector<16x32xf32>
      %c0_68 = arith.constant 0 : index
      %c0_69 = arith.constant 0 : index
      %c0_70 = arith.constant 0 : index
      %162 = vector.load %arg6[%c0_68, %c0_69, %c0_70] : memref<1x2x32xf32, #tpu.memory_space<vmem>>, vector<1x1x32xf32>
      %163 = vector.shape_cast %162 : vector<1x1x32xf32> to vector<1x32xf32>
      %c0_71 = arith.constant 0 : index
      %c1 = arith.constant 1 : index
      %c0_72 = arith.constant 0 : index
      %164 = vector.load %arg6[%c0_71, %c1, %c0_72] : memref<1x2x32xf32, #tpu.memory_space<vmem>>, vector<1x1x32xf32>
      %165 = vector.shape_cast %164 : vector<1x1x32xf32> to vector<1x32xf32>
      %cst_73 = arith.constant dense<0.000000e+00> : vector<16xf32>
      %166 = vector.multi_reduction <add>, %161, %cst_73 [1] : vector<16x32xf32> to vector<16xf32>
      %167 = vector.shape_cast %166 : vector<16xf32> to vector<16x1xf32>
      %cst_74 = arith.constant 3.200000e+01 : f32
      %168 = vector.broadcast %cst_74 : f32 to vector<16x1xf32>
      %169 = arith.divf %167, %168 : vector<16x1xf32>
      %170 = vector.broadcast %169 : vector<16x1xf32> to vector<16x32xf32>
      %171 = arith.subf %161, %170 : vector<16x32xf32>
      %172 = arith.mulf %171, %171 : vector<16x32xf32>
      %cst_75 = arith.constant dense<0.000000e+00> : vector<16xf32>
      %173 = vector.multi_reduction <add>, %172, %cst_75 [1] : vector<16x32xf32> to vector<16xf32>
      %174 = vector.shape_cast %173 : vector<16xf32> to vector<16x1xf32>
      %cst_76 = arith.constant 3.200000e+01 : f32
      %175 = vector.broadcast %cst_76 : f32 to vector<16x1xf32>
      %176 = arith.divf %174, %175 : vector<16x1xf32>
      %177 = vector.broadcast %169 : vector<16x1xf32> to vector<16x32xf32>
      %178 = arith.subf %161, %177 : vector<16x32xf32>
      %cst_77 = arith.constant 9.99999996E-13 : f32
      %179 = vector.broadcast %cst_77 : f32 to vector<16x1xf32>
      %180 = arith.addf %176, %179 : vector<16x1xf32>
      %181 = math.rsqrt %180 : vector<16x1xf32>
      %182 = vector.broadcast %181 : vector<16x1xf32> to vector<16x32xf32>
      %183 = arith.mulf %178, %182 : vector<16x32xf32>
      %184 = vector.broadcast %163 : vector<1x32xf32> to vector<16x32xf32>
      %185 = arith.mulf %183, %184 : vector<16x32xf32>
      %186 = vector.broadcast %165 : vector<1x32xf32> to vector<16x32xf32>
      %187 = arith.addf %185, %186 : vector<16x32xf32>
      %c0_78 = arith.constant 0 : index
      %c0_79 = arith.constant 0 : index
      %188 = vector.load %arg15[%c0_78, %c0_79] : memref<16x32xf32, #tpu.memory_space<vmem>>, vector<16x32xf32>
      tpu.vector_store %arg15[%c0_78, %c0_79], %187 {strides = array<i32>} : memref<16x32xf32, #tpu.memory_space<vmem>>, vector<16x32xf32>,
    } else {
    }
    %c0 = arith.constant 0 : index
    %c0_1 = arith.constant 0 : index
    %3 = vector.load %arg15[%c0, %c0_1] : memref<16x32xf32, #tpu.memory_space<vmem>>, vector<16x32xf32>
    %c0_2 = arith.constant 0 : index
    %c0_3 = arith.constant 0 : index
    %c0_4 = arith.constant 0 : index
    %c0_5 = arith.constant 0 : index
    %4 = vector.load %arg4[%c0_2, %c0_3, %c0_4, %c0_5] : memref<1x2x1x8xf32, #tpu.memory_space<vmem>>, vector<1x2x1x8xf32>
    %5 = vector.shape_cast %4 : vector<1x2x1x8xf32> to vector<2x1x8xf32>
    %c0_6 = arith.constant 0 : index
    %c0_7 = arith.constant 0 : index
    %c0_8 = arith.constant 0 : index
    %c0_9 = arith.constant 0 : index
    %6 = vector.load %arg13[%c0_6, %c0_7, %c0_8, %c0_9] : memref<1x1x6x32xf32, #tpu.memory_space<vmem>>, vector<1x1x6x32xf32>
    %7 = vector.shape_cast %6 : vector<1x1x6x32xf32> to vector<6x32xf32>
    %8 = vector.extract_strided_slice %7 {offsets = [0, 0], sizes = [1, 32], strides = [1, 1]} : vector<6x32xf32> to vector<1x32xf32>
    %9 = vector.extract_strided_slice %7 {offsets = [1, 0], sizes = [1, 32], strides = [1, 1]} : vector<6x32xf32> to vector<1x32xf32>
    %10 = vector.extract_strided_slice %7 {offsets = [2, 0], sizes = [1, 32], strides = [1, 1]} : vector<6x32xf32> to vector<1x32xf32>
    %11 = vector.extract_strided_slice %7 {offsets = [3, 0], sizes = [1, 32], strides = [1, 1]} : vector<6x32xf32> to vector<1x32xf32>
    %12 = vector.extract_strided_slice %7 {offsets = [4, 0], sizes = [1, 32], strides = [1, 1]} : vector<6x32xf32> to vector<1x32xf32>
    %13 = vector.extract_strided_slice %7 {offsets = [5, 0], sizes = [1, 32], strides = [1, 1]} : vector<6x32xf32> to vector<1x32xf32>
    %14 = arith.truncf %3 : vector<16x32xf32> to vector<16x32xbf16>
    %c0_10 = arith.constant 0 : index
    %c0_11 = arith.constant 0 : index
    %c0_12 = arith.constant 0 : index
    %c0_13 = arith.constant 0 : index
    %15 = vector.load %arg7[%c0_10, %c0_11, %c0_12, %c0_13] : memref<1x1x32x96xbf16, #tpu.memory_space<vmem>>, vector<1x1x32x96xbf16>
    %16 = vector.shape_cast %15 : vector<1x1x32x96xbf16> to vector<32x96xbf16>
    %cst = arith.constant dense<0.000000e+00> : vector<16x96xf32>
    %17 = tpu.matmul %14, %16, %cst {dimension_numbers = #tpu.dot_dimension_numbers<[1], [0], [0], [1], [0, 0, 1, 1], [], []>} : vector<16x32xbf16>, vector<32x96xbf16>, vector<16x96xf32> -> vector<16x96xf32>
    %c0_14 = arith.constant 0 : index
    %c0_15 = arith.constant 0 : index
    %c0_16 = arith.constant 0 : index
    %c0_17 = arith.constant 0 : index
    %18 = vector.load %arg8[%c0_14, %c0_15, %c0_16, %c0_17] : memref<1x1x1x96xf32, #tpu.memory_space<vmem>>, vector<1x1x1x96xf32>
    %19 = vector.shape_cast %18 : vector<1x1x1x96xf32> to vector<1x96xf32>
    %20 = vector.broadcast %19 : vector<1x96xf32> to vector<16x96xf32>
    %21 = arith.addf %17, %20 : vector<16x96xf32>
    %22 = vector.extract_strided_slice %21 {offsets = [0, 0], sizes = [16, 16], strides = [1, 1]} : vector<16x96xf32> to vector<16x16xf32>
    %23 = vector.shape_cast %22 : vector<16x16xf32> to vector<2x8x16xf32>
    %24 = arith.truncf %23 : vector<2x8x16xf32> to vector<2x8x16xbf16>
    %25 = vector.extract_strided_slice %21 {offsets = [0, 32], sizes = [16, 16], strides = [1, 1]} : vector<16x96xf32> to vector<16x16xf32>
    %26 = vector.shape_cast %25 : vector<16x16xf32> to vector<2x8x16xf32>
    %27 = arith.truncf %26 : vector<2x8x16xf32> to vector<2x8x16xbf16>
    %28 = vector.extract_strided_slice %21 {offsets = [0, 64], sizes = [16, 16], strides = [1, 1]} : vector<16x96xf32> to vector<16x16xf32>
    %29 = vector.shape_cast %28 : vector<16x16xf32> to vector<2x8x16xf32>
    %30 = arith.truncf %29 : vector<2x8x16xf32> to vector<2x8x16xbf16>
    "tpu.trace_start"() <{level = 10 : i32, message = "bqd,bkd->bqk"}> : () -> ()
    %cst_18 = arith.constant dense<0.000000e+00> : vector<2x8x8xf32>
    %31 = tpu.matmul %24, %27, %cst_18 {dimension_numbers = #tpu.dot_dimension_numbers<[2], [2], [1], [1], [0, 0, 0, 1, 1, 1], [0], [0]>} : vector<2x8x16xbf16>, vector<2x8x16xbf16>, vector<2x8x8xf32> -> vector<2x8x8xf32>
    "tpu.trace_stop"() : () -> ()
    %cst_19 = arith.constant 2.500000e-01 : f32
    %32 = vector.broadcast %cst_19 : f32 to vector<2x8x8xf32>
    %33 = arith.mulf %31, %32 : vector<2x8x8xf32>
    %34 = vector.broadcast %5 : vector<2x1x8xf32> to vector<2x8x8xf32>
    %35 = arith.addf %33, %34 : vector<2x8x8xf32>
    %cst_20 = arith.constant dense<0xFF800000> : vector<2x8xf32>
    %36 = vector.multi_reduction <maximumf>, %35, %cst_20 [2] : vector<2x8x8xf32> to vector<2x8xf32>
    %37 = vector.shape_cast %36 : vector<2x8xf32> to vector<2x8x1xf32>
    %38 = vector.broadcast %37 : vector<2x8x1xf32> to vector<2x8x8xf32>
    %39 = arith.subf %35, %38 : vector<2x8x8xf32>
    %40 = math.exp %39 : vector<2x8x8xf32>
    %cst_21 = arith.constant dense<0.000000e+00> : vector<2x8xf32>
    %41 = vector.multi_reduction <add>, %40, %cst_21 [2] : vector<2x8x8xf32> to vector<2x8xf32>
    %42 = vector.shape_cast %41 : vector<2x8xf32> to vector<2x8x1xf32>
    %43 = tpu.reciprocal %42 {approx = true} : vector<2x8x1xf32> -> vector<2x8x1xf32>
    %44 = vector.broadcast %43 : vector<2x8x1xf32> to vector<2x8x8xf32>
    %45 = arith.mulf %40, %44 : vector<2x8x8xf32>
    %46 = arith.truncf %45 : vector<2x8x8xf32> to vector<2x8x8xbf16>
    "tpu.trace_start"() <{level = 10 : i32, message = "bqk,bkd->bqd"}> : () -> ()
    %cst_22 = arith.constant dense<0.000000e+00> : vector<2x8x16xf32>
    %47 = tpu.matmul %46, %30, %cst_22 {dimension_numbers = #tpu.dot_dimension_numbers<[2], [1], [1], [2], [0, 0, 0, 1, 1, 2], [0], [0]>} : vector<2x8x8xbf16>, vector<2x8x16xbf16>, vector<2x8x16xf32> -> vector<2x8x16xf32>
    "tpu.trace_stop"() : () -> ()
    %48 = vector.extract_strided_slice %21 {offsets = [0, 16], sizes = [16, 16], strides = [1, 1]} : vector<16x96xf32> to vector<16x16xf32>
    %49 = vector.shape_cast %48 : vector<16x16xf32> to vector<2x8x16xf32>
    %50 = arith.truncf %49 : vector<2x8x16xf32> to vector<2x8x16xbf16>
    %51 = vector.extract_strided_slice %21 {offsets = [0, 48], sizes = [16, 16], strides = [1, 1]} : vector<16x96xf32> to vector<16x16xf32>
    %52 = vector.shape_cast %51 : vector<16x16xf32> to vector<2x8x16xf32>
    %53 = arith.truncf %52 : vector<2x8x16xf32> to vector<2x8x16xbf16>
    %54 = vector.extract_strided_slice %21 {offsets = [0, 80], sizes = [16, 16], strides = [1, 1]} : vector<16x96xf32> to vector<16x16xf32>
    %55 = vector.shape_cast %54 : vector<16x16xf32> to vector<2x8x16xf32>
    %56 = arith.truncf %55 : vector<2x8x16xf32> to vector<2x8x16xbf16>
    "tpu.trace_start"() <{level = 10 : i32, message = "bqd,bkd->bqk"}> : () -> ()
    %cst_23 = arith.constant dense<0.000000e+00> : vector<2x8x8xf32>
    %57 = tpu.matmul %50, %53, %cst_23 {dimension_numbers = #tpu.dot_dimension_numbers<[2], [2], [1], [1], [0, 0, 0, 1, 1, 1], [0], [0]>} : vector<2x8x16xbf16>, vector<2x8x16xbf16>, vector<2x8x8xf32> -> vector<2x8x8xf32>
    "tpu.trace_stop"() : () -> ()
    %cst_24 = arith.constant 2.500000e-01 : f32
    %58 = vector.broadcast %cst_24 : f32 to vector<2x8x8xf32>
    %59 = arith.mulf %57, %58 : vector<2x8x8xf32>
    %60 = vector.broadcast %5 : vector<2x1x8xf32> to vector<2x8x8xf32>
    %61 = arith.addf %59, %60 : vector<2x8x8xf32>
    %cst_25 = arith.constant dense<0xFF800000> : vector<2x8xf32>
    %62 = vector.multi_reduction <maximumf>, %61, %cst_25 [2] : vector<2x8x8xf32> to vector<2x8xf32>
    %63 = vector.shape_cast %62 : vector<2x8xf32> to vector<2x8x1xf32>
    %64 = vector.broadcast %63 : vector<2x8x1xf32> to vector<2x8x8xf32>
    %65 = arith.subf %61, %64 : vector<2x8x8xf32>
    %66 = math.exp %65 : vector<2x8x8xf32>
    %cst_26 = arith.constant dense<0.000000e+00> : vector<2x8xf32>
    %67 = vector.multi_reduction <add>, %66, %cst_26 [2] : vector<2x8x8xf32> to vector<2x8xf32>
    %68 = vector.shape_cast %67 : vector<2x8xf32> to vector<2x8x1xf32>
    %69 = tpu.reciprocal %68 {approx = true} : vector<2x8x1xf32> -> vector<2x8x1xf32>
    %70 = vector.broadcast %69 : vector<2x8x1xf32> to vector<2x8x8xf32>
    %71 = arith.mulf %66, %70 : vector<2x8x8xf32>
    %72 = arith.truncf %71 : vector<2x8x8xf32> to vector<2x8x8xbf16>
    "tpu.trace_start"() <{level = 10 : i32, message = "bqk,bkd->bqd"}> : () -> ()
    %cst_27 = arith.constant dense<0.000000e+00> : vector<2x8x16xf32>
    %73 = tpu.matmul %72, %56, %cst_27 {dimension_numbers = #tpu.dot_dimension_numbers<[2], [1], [1], [2], [0, 0, 0, 1, 1, 2], [0], [0]>} : vector<2x8x8xbf16>, vector<2x8x16xbf16>, vector<2x8x16xf32> -> vector<2x8x16xf32>
    "tpu.trace_stop"() : () -> ()
    %74 = tpu.concatenate %47, %73 in 2 : vector<2x8x16xf32>, vector<2x8x16xf32> -> vector<2x8x32xf32>
    %75 = vector.shape_cast %74 : vector<2x8x32xf32> to vector<16x32xf32>
    %76 = arith.truncf %75 : vector<16x32xf32> to vector<16x32xbf16>
    %c0_28 = arith.constant 0 : index
    %c0_29 = arith.constant 0 : index
    %c0_30 = arith.constant 0 : index
    %c0_31 = arith.constant 0 : index
    %77 = vector.load %arg9[%c0_28, %c0_29, %c0_30, %c0_31] : memref<1x1x32x32xbf16, #tpu.memory_space<vmem>>, vector<1x1x32x32xbf16>
    %78 = vector.shape_cast %77 : vector<1x1x32x32xbf16> to vector<32x32xbf16>
    %cst_32 = arith.constant dense<0.000000e+00> : vector<16x32xf32>
    %79 = tpu.matmul %76, %78, %cst_32 {dimension_numbers = #tpu.dot_dimension_numbers<[1], [0], [0], [1], [0, 0, 1, 1], [], []>} : vector<16x32xbf16>, vector<32x32xbf16>, vector<16x32xf32> -> vector<16x32xf32>
    %80 = vector.broadcast %8 : vector<1x32xf32> to vector<16x32xf32>
    %81 = arith.addf %79, %80 : vector<16x32xf32>
    %82 = arith.addf %3, %81 : vector<16x32xf32>
    %cst_33 = arith.constant dense<0.000000e+00> : vector<16xf32>
    %83 = vector.multi_reduction <add>, %82, %cst_33 [1] : vector<16x32xf32> to vector<16xf32>
    %84 = vector.shape_cast %83 : vector<16xf32> to vector<16x1xf32>
    %cst_34 = arith.constant 3.200000e+01 : f32
    %85 = vector.broadcast %cst_34 : f32 to vector<16x1xf32>
    %86 = arith.divf %84, %85 : vector<16x1xf32>
    %87 = vector.broadcast %86 : vector<16x1xf32> to vector<16x32xf32>
    %88 = arith.subf %82, %87 : vector<16x32xf32>
    %89 = arith.mulf %88, %88 : vector<16x32xf32>
    %cst_35 = arith.constant dense<0.000000e+00> : vector<16xf32>
    %90 = vector.multi_reduction <add>, %89, %cst_35 [1] : vector<16x32xf32> to vector<16xf32>
    %91 = vector.shape_cast %90 : vector<16xf32> to vector<16x1xf32>
    %cst_36 = arith.constant 3.200000e+01 : f32
    %92 = vector.broadcast %cst_36 : f32 to vector<16x1xf32>
    %93 = arith.divf %91, %92 : vector<16x1xf32>
    %94 = vector.broadcast %86 : vector<16x1xf32> to vector<16x32xf32>
    %95 = arith.subf %82, %94 : vector<16x32xf32>
    %cst_37 = arith.constant 9.99999996E-13 : f32
    %96 = vector.broadcast %cst_37 : f32 to vector<16x1xf32>
    %97 = arith.addf %93, %96 : vector<16x1xf32>
    %98 = math.rsqrt %97 : vector<16x1xf32>
    %99 = vector.broadcast %98 : vector<16x1xf32> to vector<16x32xf32>
    %100 = arith.mulf %95, %99 : vector<16x32xf32>
    %101 = vector.broadcast %9 : vector<1x32xf32> to vector<16x32xf32>
    %102 = arith.mulf %100, %101 : vector<16x32xf32>
    %103 = vector.broadcast %10 : vector<1x32xf32> to vector<16x32xf32>
    %104 = arith.addf %102, %103 : vector<16x32xf32>
    %105 = arith.truncf %104 : vector<16x32xf32> to vector<16x32xbf16>
    %c0_38 = arith.constant 0 : index
    %c0_39 = arith.constant 0 : index
    %c0_40 = arith.constant 0 : index
    %c0_41 = arith.constant 0 : index
    %106 = vector.load %arg10[%c0_38, %c0_39, %c0_40, %c0_41] : memref<1x1x32x64xbf16, #tpu.memory_space<vmem>>, vector<1x1x32x64xbf16>
    %107 = vector.shape_cast %106 : vector<1x1x32x64xbf16> to vector<32x64xbf16>
    %cst_42 = arith.constant dense<0.000000e+00> : vector<16x64xf32>
    %108 = tpu.matmul %105, %107, %cst_42 {dimension_numbers = #tpu.dot_dimension_numbers<[1], [0], [0], [1], [0, 0, 1, 1], [], []>} : vector<16x32xbf16>, vector<32x64xbf16>, vector<16x64xf32> -> vector<16x64xf32>
    %c0_43 = arith.constant 0 : index
    %c0_44 = arith.constant 0 : index
    %c0_45 = arith.constant 0 : index
    %c0_46 = arith.constant 0 : index
    %109 = vector.load %arg11[%c0_43, %c0_44, %c0_45, %c0_46] : memref<1x1x1x64xf32, #tpu.memory_space<vmem>>, vector<1x1x1x64xf32>
    %110 = vector.shape_cast %109 : vector<1x1x1x64xf32> to vector<1x64xf32>
    %111 = vector.broadcast %110 : vector<1x64xf32> to vector<16x64xf32>
    %112 = arith.addf %108, %111 : vector<16x64xf32>
    %113 = arith.mulf %112, %112 : vector<16x64xf32>
    %114 = arith.mulf %112, %113 : vector<16x64xf32>
    %cst_47 = arith.constant 4.471500e-02 : f32
    %115 = vector.broadcast %cst_47 : f32 to vector<16x64xf32>
    %116 = arith.mulf %115, %114 : vector<16x64xf32>
    %117 = arith.addf %112, %116 : vector<16x64xf32>
    %cst_48 = arith.constant 0.797884583 : f32
    %118 = vector.broadcast %cst_48 : f32 to vector<16x64xf32>
    %119 = arith.mulf %118, %117 : vector<16x64xf32>
    %120 = math.tanh %119 : vector<16x64xf32>
    %cst_49 = arith.constant 1.000000e+00 : f32
    %121 = vector.broadcast %cst_49 : f32 to vector<16x64xf32>
    %122 = arith.addf %121, %120 : vector<16x64xf32>
    %cst_50 = arith.constant 5.000000e-01 : f32
    %123 = vector.broadcast %cst_50 : f32 to vector<16x64xf32>
    %124 = arith.mulf %123, %122 : vector<16x64xf32>
    %125 = arith.mulf %112, %124 : vector<16x64xf32>
    %126 = arith.truncf %125 : vector<16x64xf32> to vector<16x64xbf16>
    %c0_51 = arith.constant 0 : index
    %c0_52 = arith.constant 0 : index
    %c0_53 = arith.constant 0 : index
    %c0_54 = arith.constant 0 : index
    %127 = vector.load %arg12[%c0_51, %c0_52, %c0_53, %c0_54] : memref<1x1x64x32xbf16, #tpu.memory_space<vmem>>, vector<1x1x64x32xbf16>
    %128 = vector.shape_cast %127 : vector<1x1x64x32xbf16> to vector<64x32xbf16>
    %cst_55 = arith.constant dense<0.000000e+00> : vector<16x32xf32>
    %129 = tpu.matmul %126, %128, %cst_55 {dimension_numbers = #tpu.dot_dimension_numbers<[1], [0], [0], [1], [0, 0, 1, 1], [], []>} : vector<16x64xbf16>, vector<64x32xbf16>, vector<16x32xf32> -> vector<16x32xf32>
    %130 = vector.broadcast %11 : vector<1x32xf32> to vector<16x32xf32>
    %131 = arith.addf %129, %130 : vector<16x32xf32>
    %132 = arith.addf %104, %131 : vector<16x32xf32>
    %cst_56 = arith.constant dense<0.000000e+00> : vector<16xf32>
    %133 = vector.multi_reduction <add>, %132, %cst_56 [1] : vector<16x32xf32> to vector<16xf32>
    %134 = vector.shape_cast %133 : vector<16xf32> to vector<16x1xf32>
    %cst_57 = arith.constant 3.200000e+01 : f32
    %135 = vector.broadcast %cst_57 : f32 to vector<16x1xf32>
    %136 = arith.divf %134, %135 : vector<16x1xf32>
    %137 = vector.broadcast %136 : vector<16x1xf32> to vector<16x32xf32>
    %138 = arith.subf %132, %137 : vector<16x32xf32>
    %139 = arith.mulf %138, %138 : vector<16x32xf32>
    %cst_58 = arith.constant dense<0.000000e+00> : vector<16xf32>
    %140 = vector.multi_reduction <add>, %139, %cst_58 [1] : vector<16x32xf32> to vector<16xf32>
    %141 = vector.shape_cast %140 : vector<16xf32> to vector<16x1xf32>
    %cst_59 = arith.constant 3.200000e+01 : f32
    %142 = vector.broadcast %cst_59 : f32 to vector<16x1xf32>
    %143 = arith.divf %141, %142 : vector<16x1xf32>
    %144 = vector.broadcast %136 : vector<16x1xf32> to vector<16x32xf32>
    %145 = arith.subf %132, %144 : vector<16x32xf32>
    %cst_60 = arith.constant 9.99999996E-13 : f32
    %146 = vector.broadcast %cst_60 : f32 to vector<16x1xf32>
    %147 = arith.addf %143, %146 : vector<16x1xf32>
    %148 = math.rsqrt %147 : vector<16x1xf32>
    %149 = vector.broadcast %148 : vector<16x1xf32> to vector<16x32xf32>
    %150 = arith.mulf %145, %149 : vector<16x32xf32>
    %151 = vector.broadcast %12 : vector<1x32xf32> to vector<16x32xf32>
    %152 = arith.mulf %150, %151 : vector<16x32xf32>
    %153 = vector.broadcast %13 : vector<1x32xf32> to vector<16x32xf32>
    %154 = arith.addf %152, %153 : vector<16x32xf32>
    %c0_61 = arith.constant 0 : index
    %c0_62 = arith.constant 0 : index
    %155 = vector.load %arg15[%c0_61, %c0_62] : memref<16x32xf32, #tpu.memory_space<vmem>>, vector<16x32xf32>
    tpu.vector_store %arg15[%c0_61, %c0_62], %154 {strides = array<i32>} : memref<16x32xf32, #tpu.memory_space<vmem>>, vector<16x32xf32>,
    %c1_i32 = arith.constant 1 : i32
    %156 = arith.cmpi eq, %arg1, %c1_i32 : i32
    %157 = arith.extui %156 : i1 to i32
    %c0_i32_63 = arith.constant 0 : i32
    %158 = arith.cmpi ne, %157, %c0_i32_63 : i32
    scf.if %158 {
      %159 = vector.shape_cast %154 : vector<16x32xf32> to vector<2x8x32xf32>
      %c0_64 = arith.constant 0 : index
      %c0_65 = arith.constant 0 : index
      %c0_66 = arith.constant 0 : index
      %c0_67 = arith.constant 0 : index
      %160 = vector.load %arg5[%c0_64, %c0_65, %c0_66, %c0_67] : memref<1x2x8x1xf32, #tpu.memory_space<vmem>>, vector<1x2x8x1xf32>
      %161 = vector.shape_cast %160 : vector<1x2x8x1xf32> to vector<2x8x1xf32>
      %162 = vector.broadcast %161 : vector<2x8x1xf32> to vector<2x8x32xf32>
      %163 = arith.mulf %159, %162 : vector<2x8x32xf32>
      %cst_68 = arith.constant dense<0.000000e+00> : vector<2x32xf32>
      %164 = vector.multi_reduction <add>, %163, %cst_68 [1] : vector<2x8x32xf32> to vector<2x32xf32>
      %cst_69 = arith.constant dense<0.000000e+00> : vector<2x1xf32>
      %165 = vector.multi_reduction <add>, %161, %cst_69 [1] : vector<2x8x1xf32> to vector<2x1xf32>
      %cst_70 = arith.constant 9.99999974E-5 : f32
      %166 = vector.broadcast %cst_70 : f32 to vector<2x1xf32>
      %167 = arith.maximumf %165, %166 : vector<2x1xf32>
      %168 = tpu.reciprocal %167 {approx = true} : vector<2x1xf32> -> vector<2x1xf32>
      %169 = vector.broadcast %168 : vector<2x1xf32> to vector<2x32xf32>
      %170 = arith.mulf %164, %169 : vector<2x32xf32>
      %171 = arith.mulf %170, %170 : vector<2x32xf32>
      %cst_71 = arith.constant dense<0.000000e+00> : vector<2xf32>
      %172 = vector.multi_reduction <add>, %171, %cst_71 [1] : vector<2x32xf32> to vector<2xf32>
      %173 = vector.shape_cast %172 : vector<2xf32> to vector<2x1xf32>
      %cst_72 = arith.constant 1.000000e-24 : f32
      %174 = vector.broadcast %cst_72 : f32 to vector<2x1xf32>
      %175 = arith.maximumf %173, %174 : vector<2x1xf32>
      %176 = math.rsqrt %175 : vector<2x1xf32>
      %177 = vector.broadcast %176 : vector<2x1xf32> to vector<2x32xf32>
      %178 = arith.mulf %170, %177 : vector<2x32xf32>
      %c0_73 = arith.constant 0 : index
      %c0_74 = arith.constant 0 : index
      %c0_75 = arith.constant 0 : index
      %179 = vector.load %arg14[%c0_73, %c0_74, %c0_75] : memref<1x2x32xf32, #tpu.memory_space<vmem>>, vector<1x2x32xf32>
      %180 = vector.shape_cast %179 : vector<1x2x32xf32> to vector<2x32xf32>
      %181 = vector.shape_cast %178 : vector<2x32xf32> to vector<1x2x32xf32>
      tpu.vector_store %arg14[%c0_73, %c0_74, %c0_75], %181 {strides = array<i32>} : memref<1x2x32xf32, #tpu.memory_space<vmem>>, vector<1x2x32xf32>,
    } else {
    }
    return
  }
  func.func @transform_0(%arg0: i32, %arg1: i32, %arg2: memref<3xi32, #tpu.memory_space<smem>>) -> (i32, i32, i32, i32) {
    %c0_i32 = arith.constant 0 : i32
    %c0_i32_0 = arith.constant 0 : i32
    %c0_i32_1 = arith.constant 0 : i32
    %c0_i32_2 = arith.constant 0 : i32
    return %arg0, %c0_i32, %c0_i32_0, %c0_i32_1 : i32, i32, i32, i32
  }
  func.func @transform_1(%arg0: i32, %arg1: i32, %arg2: memref<3xi32, #tpu.memory_space<smem>>) -> (i32, i32, i32, i32) {
    %c0_i32 = arith.constant 0 : i32
    %c0_i32_0 = arith.constant 0 : i32
    %c0_i32_1 = arith.constant 0 : i32
    %c0_i32_2 = arith.constant 0 : i32
    return %arg0, %c0_i32, %c0_i32_0, %c0_i32_1 : i32, i32, i32, i32
  }
  func.func @transform_2(%arg0: i32, %arg1: i32, %arg2: memref<3xi32, #tpu.memory_space<smem>>) -> (i32, i32, i32, i32) {
    %c0_i32 = arith.constant 0 : i32
    %c0_i32_0 = arith.constant 0 : i32
    %c0_i32_1 = arith.constant 0 : i32
    %c0_i32_2 = arith.constant 0 : i32
    return %arg0, %c0_i32, %c0_i32_0, %c0_i32_1 : i32, i32, i32, i32
  }
  func.func @transform_3(%arg0: i32, %arg1: i32, %arg2: memref<3xi32, #tpu.memory_space<smem>>) -> (i32, i32, i32) {
    %0 = arith.index_cast %arg0 : i32 to index
    %1 = memref.load %arg2[%0] : memref<3xi32, #tpu.memory_space<smem>>
    %c0_i32 = arith.constant 0 : i32
    %c0_i32_0 = arith.constant 0 : i32
    %c0_i32_1 = arith.constant 0 : i32
    return %1, %c0_i32, %c0_i32_0 : i32, i32, i32
  }
  func.func @transform_4(%arg0: i32, %arg1: i32, %arg2: memref<3xi32, #tpu.memory_space<smem>>) -> (i32, i32, i32, i32) {
    %0 = arith.index_cast %arg0 : i32 to index
    %1 = memref.load %arg2[%0] : memref<3xi32, #tpu.memory_space<smem>>
    %c0_i32 = arith.constant 0 : i32
    %c0_i32_0 = arith.constant 0 : i32
    %c0_i32_1 = arith.constant 0 : i32
    return %1, %arg1, %c0_i32, %c0_i32_0 : i32, i32, i32, i32
  }
  func.func @transform_5(%arg0: i32, %arg1: i32, %arg2: memref<3xi32, #tpu.memory_space<smem>>) -> (i32, i32, i32, i32) {
    %0 = arith.index_cast %arg0 : i32 to index
    %1 = memref.load %arg2[%0] : memref<3xi32, #tpu.memory_space<smem>>
    %c0_i32 = arith.constant 0 : i32
    %c0_i32_0 = arith.constant 0 : i32
    %c0_i32_1 = arith.constant 0 : i32
    return %1, %arg1, %c0_i32, %c0_i32_0 : i32, i32, i32, i32
  }
  func.func @transform_6(%arg0: i32, %arg1: i32, %arg2: memref<3xi32, #tpu.memory_space<smem>>) -> (i32, i32, i32, i32) {
    %0 = arith.index_cast %arg0 : i32 to index
    %1 = memref.load %arg2[%0] : memref<3xi32, #tpu.memory_space<smem>>
    %c0_i32 = arith.constant 0 : i32
    %c0_i32_0 = arith.constant 0 : i32
    %c0_i32_1 = arith.constant 0 : i32
    return %1, %arg1, %c0_i32, %c0_i32_0 : i32, i32, i32, i32
  }
  func.func @transform_7(%arg0: i32, %arg1: i32, %arg2: memref<3xi32, #tpu.memory_space<smem>>) -> (i32, i32, i32, i32) {
    %0 = arith.index_cast %arg0 : i32 to index
    %1 = memref.load %arg2[%0] : memref<3xi32, #tpu.memory_space<smem>>
    %c0_i32 = arith.constant 0 : i32
    %c0_i32_0 = arith.constant 0 : i32
    %c0_i32_1 = arith.constant 0 : i32
    return %1, %arg1, %c0_i32, %c0_i32_0 : i32, i32, i32, i32
  }
  func.func @transform_8(%arg0: i32, %arg1: i32, %arg2: memref<3xi32, #tpu.memory_space<smem>>) -> (i32, i32, i32, i32) {
    %0 = arith.index_cast %arg0 : i32 to index
    %1 = memref.load %arg2[%0] : memref<3xi32, #tpu.memory_space<smem>>
    %c0_i32 = arith.constant 0 : i32
    %c0_i32_0 = arith.constant 0 : i32
    %c0_i32_1 = arith.constant 0 : i32
    return %1, %arg1, %c0_i32, %c0_i32_0 : i32, i32, i32, i32
  }
  func.func @transform_9(%arg0: i32, %arg1: i32, %arg2: memref<3xi32, #tpu.memory_space<smem>>) -> (i32, i32, i32, i32) {
    %0 = arith.index_cast %arg0 : i32 to index
    %1 = memref.load %arg2[%0] : memref<3xi32, #tpu.memory_space<smem>>
    %c0_i32 = arith.constant 0 : i32
    %c0_i32_0 = arith.constant 0 : i32
    %c0_i32_1 = arith.constant 0 : i32
    return %1, %arg1, %c0_i32, %c0_i32_0 : i32, i32, i32, i32
  }
  func.func @transform_10(%arg0: i32, %arg1: i32, %arg2: memref<3xi32, #tpu.memory_space<smem>>) -> (i32, i32, i32, i32) {
    %0 = arith.index_cast %arg0 : i32 to index
    %1 = memref.load %arg2[%0] : memref<3xi32, #tpu.memory_space<smem>>
    %c0_i32 = arith.constant 0 : i32
    %c0_i32_0 = arith.constant 0 : i32
    %c0_i32_1 = arith.constant 0 : i32
    return %1, %arg1, %c0_i32, %c0_i32_0 : i32, i32, i32, i32
  }
  func.func @transform_11(%arg0: i32, %arg1: i32, %arg2: memref<3xi32, #tpu.memory_space<smem>>) -> (i32, i32, i32) {
    %c0_i32 = arith.constant 0 : i32
    %c0_i32_0 = arith.constant 0 : i32
    %c0_i32_1 = arith.constant 0 : i32
    return %arg0, %c0_i32, %c0_i32_0 : i32, i32, i32
  }
}

</mosaic_0001>

<llo_original>
// kernel: custom_bert_forward.1
$region0: #{custom_bert_forward.1}
  #allocation0 [shape = 'u32[]', space=smem, size = 0x4, offset = 0x4, fixed_abs, tag = 'smem constant byte address 0x4 - core index']
  #allocation1 [shape = 'u32[144,128]{1,0:T(1,128)}', space=vmem, size = 0x12000, scoped, tag = 'internal scratch']
  #allocation2 [shape = 'f32[16,32]{1,0:T(8,128)}', space=vmem, size = 0x2000, scoped, tag = 'scratch operand']
  #allocation3 [shape = 's32[1]{0}', space=sflag, size = 0x4, scoped, tag = 'scoped memory for custom_bert_forward.1']
  #allocation4 [shape = 'u8[512]{0}', space=smem, size = 0x200, scoped, tag = 'prefetched SMEM operand 0']
  %s0 = inlined_call_operand.vmem [shape: s32[3], index: 0, kind: input, shape index: {}]
  %s1 = inlined_call_operand.vmem [shape: f32[3,2,8,32], index: 1, kind: input, shape index: {}]
  %s2 = inlined_call_operand.vmem [shape: f32[3,2,1,8], index: 2, kind: input, shape index: {}]
  %s3 = inlined_call_operand.vmem [shape: f32[3,2,8,1], index: 3, kind: input, shape index: {}]
  %s4 = inlined_call_operand.vmem [shape: f32[2,2,32], index: 4, kind: input, shape index: {}]
  %s5 = inlined_call_operand.vmem [shape: bf16[2,2,32,96], index: 5, kind: input, shape index: {}]
  %s6 = inlined_call_operand.vmem [shape: f32[2,2,1,96], index: 6, kind: input, shape index: {}]
  %s7 = inlined_call_operand.vmem [shape: bf16[2,2,32,32], index: 7, kind: input, shape index: {}]
  %s8 = inlined_call_operand.vmem [shape: bf16[2,2,32,64], index: 8, kind: input, shape index: {}]
  %s9 = inlined_call_operand.vmem [shape: f32[2,2,1,64], index: 9, kind: input, shape index: {}]
  %s10 = inlined_call_operand.vmem [shape: bf16[2,2,64,32], index: 10, kind: input, shape index: {}]
  %s11 = inlined_call_operand.vmem [shape: f32[2,2,6,32], index: 11, kind: input, shape index: {}]
  %s12 = inlined_call_operand.vmem [shape: f32[3,2,32], index: 12, kind: output, shape index: {}]
  %s13 = sld [smem:[#allocation0]]
  $region85: #{custom_bert_forward.1} parent=0
    _
  %s15 = ssub.s32 1, %s13
  %s16 = scalar_select 0, %s15, %s13
  %s17 = sshll.u32 %s0, 4
  %s18 = int_to_ptr.vmem [resolvable:$true] %s17
  %20 = dma.vmem_to_smem %s18, 16, [#allocation4], [#allocation3]
  %21 = dma.done [#allocation3], 16
  %22 = sfence
  loop: start=0, step=1, limit=8
  $region2: #{custom_bert_forward.1} parent=0 // loop_pre_header
    _
  $region3: #{custom_bert_forward.1} parent=0 // loop_header
    %s24 = sphi 0, %s28
    %p25 = scmp.ge.s32.totalorder %s24, 8
    %s31 = sphi 0, %s43
    %s32 = sphi 0, %s39
    %s33 = sphi 0, %s31
    %s34 = sphi 0, %s32
    %s35 = sphi 0, %s33
    %s36 = sphi 0, %s34
    %s46 = sphi 0, %s48
    %s49 = sphi 0, %s46
    %s50 = sphi 0, %s49
    %s66 = sphi 0, %s50
    %s72 = sphi 0, %s74
    %s75 = sphi 0, %s72
    %s76 = sphi 0, %s75
    %s92 = sphi 0, %s76
    %s98 = sphi 0, %s100
    %s101 = sphi 0, %s98
    %s102 = sphi 0, %s101
    %s118 = sphi 0, %s102
    %s126 = sphi 0, %s128
    %s129 = sphi 0, %s126
    %s130 = sphi 0, %s129
    %s146 = sphi 0, %s130
    %s156 = sphi 0, %s158
    %s159 = sphi 0, %s156
    %s160 = sphi 0, %s159
    %s176 = sphi 0, %s160
    %s186 = sphi 0, %s188
    %s189 = sphi 0, %s186
    %s190 = sphi 0, %s189
    %s206 = sphi 0, %s190
    %s216 = sphi 0, %s218
    %s219 = sphi 0, %s216
    %s220 = sphi 0, %s219
    %s236 = sphi 0, %s220
    %s246 = sphi 0, %s248
    %s249 = sphi 0, %s246
    %s250 = sphi 0, %s249
    %s266 = sphi 0, %s250
    %s276 = sphi 0, %s278
    %s279 = sphi 0, %s276
    %s280 = sphi 0, %s279
    %s296 = sphi 0, %s280
    %s306 = sphi 0, %s308
    %s309 = sphi 0, %s306
    %s310 = sphi 0, %s309
    %s326 = sphi 0, %s310
    %s336 = sphi 0, %s338
    %s339 = sphi 0, %s336
    %s340 = sphi 0, %s339
    %s356 = sphi 0, %s340
    %s362 = sphi 0, %s364
    %s365 = sphi 0, %s362
    %s366 = sphi 0, %s365
    %s382 = sphi 0, %s366
  $region4: #{custom_bert_forward.1} parent=0 // loop_header_branch
    %27 = sbr.rel (%p25) target = $region8
  $region5: #{custom_bert_forward.1} parent=0 // loop_body
    %s29 = ssub.s32 %s24, 1
    %s30 = ssub.s32 %s24, 2
    %s37 = sadd.s32 1, %s32
    %p38 = scmp.ge.s32.totalorder %s37, 2
    %s39 = scalar_select %p38, 0, %s37
    %s40 = sadd.s32 1, %s31
    %s41 = scalar_select %p38, %s40, %s31
    %p42 = scmp.ge.s32.totalorder %s41, 3
    %s43 = scalar_select %p42, 0, %s41
    %s44 = ssub.s32 %s31, %s43
    %p45 = scmp.eq.s32.totalorder %s44, 0
    %s47 = sadd.s32 %s46, 1
    %s48 = scalar_select %p45, %s46, %s47
    %p51 = pneg %p45
    %p52 = scmp.eq.s32.totalorder %s24, 5
    %p53 = por %p51, %p52
    %p54 = scmp.ne.s32.totalorder %s46, %s49
    %p55 = scmp.eq.s32.totalorder %s24, 0
    %p56 = por %p54, %p55
    %p57 = scmp.ne.s32.totalorder %s46, %s49
    %p58 = scmp.eq.s32.totalorder %s29, 5
    %p59 = por %p57, %p58
    %p60 = scmp.ne.s32.totalorder %s49, %s50
    %p61 = scmp.eq.s32.totalorder %s29, 0
    %p62 = por %p60, %p61
    %p63 = scmp.ne.s32.totalorder %s49, %s50
    %p64 = scmp.eq.s32.totalorder %s30, 5
    %p65 = por %p63, %p64
    %p67 = scmp.ne.s32.totalorder %s50, %s66
    %p68 = scmp.eq.s32.totalorder %s30, 0
    %p69 = por %p67, %p68
    %s70 = ssub.s32 %s31, %s43
    %p71 = scmp.eq.s32.totalorder %s70, 0
    %s73 = sadd.s32 %s72, 1
    %s74 = scalar_select %p71, %s72, %s73
    %p77 = pneg %p71
    %p78 = scmp.eq.s32.totalorder %s24, 5
    %p79 = por %p77, %p78
    %p80 = scmp.ne.s32.totalorder %s72, %s75
    %p81 = scmp.eq.s32.totalorder %s24, 0
    %p82 = por %p80, %p81
    %p83 = scmp.ne.s32.totalorder %s72, %s75
    %p84 = scmp.eq.s32.totalorder %s29, 5
    %p85 = por %p83, %p84
    %p86 = scmp.ne.s32.totalorder %s75, %s76
    %p87 = scmp.eq.s32.totalorder %s29, 0
    %p88 = por %p86, %p87
    %p89 = scmp.ne.s32.totalorder %s75, %s76
    %p90 = scmp.eq.s32.totalorder %s30, 5
    %p91 = por %p89, %p90
    %p93 = scmp.ne.s32.totalorder %s76, %s92
    %p94 = scmp.eq.s32.totalorder %s30, 0
    %p95 = por %p93, %p94
    %s96 = ssub.s32 %s31, %s43
    %p97 = scmp.eq.s32.totalorder %s96, 0
    %s99 = sadd.s32 %s98, 1
    %s100 = scalar_select %p97, %s98, %s99
    %p103 = pneg %p97
    %p104 = scmp.eq.s32.totalorder %s24, 5
    %p105 = por %p103, %p104
    %p106 = scmp.ne.s32.totalorder %s98, %s101
    %p107 = scmp.eq.s32.totalorder %s24, 0
    %p108 = por %p106, %p107
    %p109 = scmp.ne.s32.totalorder %s98, %s101
    %p110 = scmp.eq.s32.totalorder %s29, 5
    %p111 = por %p109, %p110
    %p112 = scmp.ne.s32.totalorder %s101, %s102
    %p113 = scmp.eq.s32.totalorder %s29, 0
    %p114 = por %p112, %p113
    %p115 = scmp.ne.s32.totalorder %s101, %s102
    %p116 = scmp.eq.s32.totalorder %s30, 5
    %p117 = por %p115, %p116
    %p119 = scmp.ne.s32.totalorder %s102, %s118
    %p120 = scmp.eq.s32.totalorder %s30, 0
    %p121 = por %p119, %p120
    %s122 = sld [smem:[#allocation4 + %s31]]
    %s123 = sld [smem:[#allocation4 + %s43]]
    %s124 = ssub.s32 %s122, %s123
    %p125 = scmp.eq.s32.totalorder %s124, 0
    %s127 = sadd.s32 %s126, 1
    %s128 = scalar_select %p125, %s126, %s127
    %p131 = pneg %p125
    %p132 = scmp.eq.s32.totalorder %s24, 5
    %p133 = por %p131, %p132
    %p134 = scmp.ne.s32.totalorder %s126, %s129
    %p135 = scmp.eq.s32.totalorder %s24, 0
    %p136 = por %p134, %p135
    %p137 = scmp.ne.s32.totalorder %s126, %s129
    %p138 = scmp.eq.s32.totalorder %s29, 5
    %p139 = por %p137, %p138
    %p140 = scmp.ne.s32.totalorder %s129, %s130
    %p141 = scmp.eq.s32.totalorder %s29, 0
    %p142 = por %p140, %p141
    %p143 = scmp.ne.s32.totalorder %s129, %s130
    %p144 = scmp.eq.s32.totalorder %s30, 5
    %p145 = por %p143, %p144
    %p147 = scmp.ne.s32.totalorder %s130, %s146
    %p148 = scmp.eq.s32.totalorder %s30, 0
    %p149 = por %p147, %p148
    %s150 = sld [smem:[#allocation4 + %s31]]
    %s151 = sld [smem:[#allocation4 + %s43]]
    %s152 = ssub.s32 %s150, %s151
    %s153 = ssub.s32 %s32, %s39
    %s154 = sor.u32 %s152, %s153
    %p155 = scmp.eq.s32.totalorder %s154, 0
    %s157 = sadd.s32 %s156, 1
    %s158 = scalar_select %p155, %s156, %s157
    %p161 = pneg %p155
    %p162 = scmp.eq.s32.totalorder %s24, 5
    %p163 = por %p161, %p162
    %p164 = scmp.ne.s32.totalorder %s156, %s159
    %p165 = scmp.eq.s32.totalorder %s24, 0
    %p166 = por %p164, %p165
    %p167 = scmp.ne.s32.totalorder %s156, %s159
    %p168 = scmp.eq.s32.totalorder %s29, 5
    %p169 = por %p167, %p168
    %p170 = scmp.ne.s32.totalorder %s159, %s160
    %p171 = scmp.eq.s32.totalorder %s29, 0
    %p172 = por %p170, %p171
    %p173 = scmp.ne.s32.totalorder %s159, %s160
    %p174 = scmp.eq.s32.totalorder %s30, 5
    %p175 = por %p173, %p174
    %p177 = scmp.ne.s32.totalorder %s160, %s176
    %p178 = scmp.eq.s32.totalorder %s30, 0
    %p179 = por %p177, %p178
    %s180 = sld [smem:[#allocation4 + %s31]]
    %s181 = sld [smem:[#allocation4 + %s43]]
    %s182 = ssub.s32 %s180, %s181
    %s183 = ssub.s32 %s32, %s39
    %s184 = sor.u32 %s182, %s183
    %p185 = scmp.eq.s32.totalorder %s184, 0
    %s187 = sadd.s32 %s186, 1
    %s188 = scalar_select %p185, %s186, %s187
    %p191 = pneg %p185
    %p192 = scmp.eq.s32.totalorder %s24, 5
    %p193 = por %p191, %p192
    %p194 = scmp.ne.s32.totalorder %s186, %s189
    %p195 = scmp.eq.s32.totalorder %s24, 0
    %p196 = por %p194, %p195
    %p197 = scmp.ne.s32.totalorder %s186, %s189
    %p198 = scmp.eq.s32.totalorder %s29, 5
    %p199 = por %p197, %p198
    %p200 = scmp.ne.s32.totalorder %s189, %s190
    %p201 = scmp.eq.s32.totalorder %s29, 0
    %p202 = por %p200, %p201
    %p203 = scmp.ne.s32.totalorder %s189, %s190
    %p204 = scmp.eq.s32.totalorder %s30, 5
    %p205 = por %p203, %p204
    %p207 = scmp.ne.s32.totalorder %s190, %s206
    %p208 = scmp.eq.s32.totalorder %s30, 0
    %p209 = por %p207, %p208
    %s210 = sld [smem:[#allocation4 + %s31]]
    %s211 = sld [smem:[#allocation4 + %s43]]
    %s212 = ssub.s32 %s210, %s211
    %s213 = ssub.s32 %s32, %s39
    %s214 = sor.u32 %s212, %s213
    %p215 = scmp.eq.s32.totalorder %s214, 0
    %s217 = sadd.s32 %s216, 1
    %s218 = scalar_select %p215, %s216, %s217
    %p221 = pneg %p215
    %p222 = scmp.eq.s32.totalorder %s24, 5
    %p223 = por %p221, %p222
    %p224 = scmp.ne.s32.totalorder %s216, %s219
    %p225 = scmp.eq.s32.totalorder %s24, 0
    %p226 = por %p224, %p225
    %p227 = scmp.ne.s32.totalorder %s216, %s219
    %p228 = scmp.eq.s32.totalorder %s29, 5
    %p229 = por %p227, %p228
    %p230 = scmp.ne.s32.totalorder %s219, %s220
    %p231 = scmp.eq.s32.totalorder %s29, 0
    %p232 = por %p230, %p231
    %p233 = scmp.ne.s32.totalorder %s219, %s220
    %p234 = scmp.eq.s32.totalorder %s30, 5
    %p235 = por %p233, %p234
    %p237 = scmp.ne.s32.totalorder %s220, %s236
    %p238 = scmp.eq.s32.totalorder %s30, 0
    %p239 = por %p237, %p238
    %s240 = sld [smem:[#allocation4 + %s31]]
    %s241 = sld [smem:[#allocation4 + %s43]]
    %s242 = ssub.s32 %s240, %s241
    %s243 = ssub.s32 %s32, %s39
    %s244 = sor.u32 %s242, %s243
    %p245 = scmp.eq.s32.totalorder %s244, 0
    %s247 = sadd.s32 %s246, 1
    %s248 = scalar_select %p245, %s246, %s247
    %p251 = pneg %p245
    %p252 = scmp.eq.s32.totalorder %s24, 5
    %p253 = por %p251, %p252
    %p254 = scmp.ne.s32.totalorder %s246, %s249
    %p255 = scmp.eq.s32.totalorder %s24, 0
    %p256 = por %p254, %p255
    %p257 = scmp.ne.s32.totalorder %s246, %s249
    %p258 = scmp.eq.s32.totalorder %s29, 5
    %p259 = por %p257, %p258
    %p260 = scmp.ne.s32.totalorder %s249, %s250
    %p261 = scmp.eq.s32.totalorder %s29, 0
    %p262 = por %p260, %p261
    %p263 = scmp.ne.s32.totalorder %s249, %s250
    %p264 = scmp.eq.s32.totalorder %s30, 5
    %p265 = por %p263, %p264
    %p267 = scmp.ne.s32.totalorder %s250, %s266
    %p268 = scmp.eq.s32.totalorder %s30, 0
    %p269 = por %p267, %p268
    %s270 = sld [smem:[#allocation4 + %s31]]
    %s271 = sld [smem:[#allocation4 + %s43]]
    %s272 = ssub.s32 %s270, %s271
    %s273 = ssub.s32 %s32, %s39
    %s274 = sor.u32 %s272, %s273
    %p275 = scmp.eq.s32.totalorder %s274, 0
    %s277 = sadd.s32 %s276, 1
    %s278 = scalar_select %p275, %s276, %s277
    %p281 = pneg %p275
    %p282 = scmp.eq.s32.totalorder %s24, 5
    %p283 = por %p281, %p282
    %p284 = scmp.ne.s32.totalorder %s276, %s279
    %p285 = scmp.eq.s32.totalorder %s24, 0
    %p286 = por %p284, %p285
    %p287 = scmp.ne.s32.totalorder %s276, %s279
    %p288 = scmp.eq.s32.totalorder %s29, 5
    %p289 = por %p287, %p288
    %p290 = scmp.ne.s32.totalorder %s279, %s280
    %p291 = scmp.eq.s32.totalorder %s29, 0
    %p292 = por %p290, %p291
    %p293 = scmp.ne.s32.totalorder %s279, %s280
    %p294 = scmp.eq.s32.totalorder %s30, 5
    %p295 = por %p293, %p294
    %p297 = scmp.ne.s32.totalorder %s280, %s296
    %p298 = scmp.eq.s32.totalorder %s30, 0
    %p299 = por %p297, %p298
    %s300 = sld [smem:[#allocation4 + %s31]]
    %s301 = sld [smem:[#allocation4 + %s43]]
    %s302 = ssub.s32 %s300, %s301
    %s303 = ssub.s32 %s32, %s39
    %s304 = sor.u32 %s302, %s303
    %p305 = scmp.eq.s32.totalorder %s304, 0
    %s307 = sadd.s32 %s306, 1
    %s308 = scalar_select %p305, %s306, %s307
    %p311 = pneg %p305
    %p312 = scmp.eq.s32.totalorder %s24, 5
    %p313 = por %p311, %p312
    %p314 = scmp.ne.s32.totalorder %s306, %s309
    %p315 = scmp.eq.s32.totalorder %s24, 0
    %p316 = por %p314, %p315
    %p317 = scmp.ne.s32.totalorder %s306, %s309
    %p318 = scmp.eq.s32.totalorder %s29, 5
    %p319 = por %p317, %p318
    %p320 = scmp.ne.s32.totalorder %s309, %s310
    %p321 = scmp.eq.s32.totalorder %s29, 0
    %p322 = por %p320, %p321
    %p323 = scmp.ne.s32.totalorder %s309, %s310
    %p324 = scmp.eq.s32.totalorder %s30, 5
    %p325 = por %p323, %p324
    %p327 = scmp.ne.s32.totalorder %s310, %s326
    %p328 = scmp.eq.s32.totalorder %s30, 0
    %p329 = por %p327, %p328
    %s330 = sld [smem:[#allocation4 + %s31]]
    %s331 = sld [smem:[#allocation4 + %s43]]
    %s332 = ssub.s32 %s330, %s331
    %s333 = ssub.s32 %s32, %s39
    %s334 = sor.u32 %s332, %s333
    %p335 = scmp.eq.s32.totalorder %s334, 0
    %s337 = sadd.s32 %s336, 1
    %s338 = scalar_select %p335, %s336, %s337
    %p341 = pneg %p335
    %p342 = scmp.eq.s32.totalorder %s24, 5
    %p343 = por %p341, %p342
    %p344 = scmp.ne.s32.totalorder %s336, %s339
    %p345 = scmp.eq.s32.totalorder %s24, 0
    %p346 = por %p344, %p345
    %p347 = scmp.ne.s32.totalorder %s336, %s339
    %p348 = scmp.eq.s32.totalorder %s29, 5
    %p349 = por %p347, %p348
    %p350 = scmp.ne.s32.totalorder %s339, %s340
    %p351 = scmp.eq.s32.totalorder %s29, 0
    %p352 = por %p350, %p351
    %p353 = scmp.ne.s32.totalorder %s339, %s340
    %p354 = scmp.eq.s32.totalorder %s30, 5
    %p355 = por %p353, %p354
    %p357 = scmp.ne.s32.totalorder %s340, %s356
    %p358 = scmp.eq.s32.totalorder %s30, 0
    %p359 = por %p357, %p358
    %s360 = ssub.s32 %s31, %s43
    %p361 = scmp.eq.s32.totalorder %s360, 0
    %s363 = sadd.s32 %s362, 1
    %s364 = scalar_select %p361, %s362, %s363
    %p367 = pneg %p361
    %p368 = scmp.eq.s32.totalorder %s24, 5
    %p369 = por %p367, %p368
    %p370 = scmp.ne.s32.totalorder %s362, %s365
    %p371 = scmp.eq.s32.totalorder %s24, 0
    %p372 = por %p370, %p371
    %p373 = scmp.ne.s32.totalorder %s362, %s365
    %p374 = scmp.eq.s32.totalorder %s29, 5
    %p375 = por %p373, %p374
    %p376 = scmp.ne.s32.totalorder %s365, %s366
    %p377 = scmp.eq.s32.totalorder %s29, 0
    %p378 = por %p376, %p377
    %p379 = scmp.ne.s32.totalorder %s365, %s366
    %p380 = scmp.eq.s32.totalorder %s30, 5
    %p381 = por %p379, %p380
    %p383 = scmp.ne.s32.totalorder %s366, %s382
    %p384 = scmp.eq.s32.totalorder %s30, 0
    %p385 = por %p383, %p384
    %p386 = scmp.le.s32.totalorder 1, %s24
    %p387 = scmp.lt.s32.totalorder %s24, 7
    %p388 = pnand %p386, %p387
    %p389 = pneg %p388
    // Predicated region
    $region9: #{custom_bert_forward.1} parent=5 // pred_check
      _
    $region10: #{custom_bert_forward.1} parent=5 // pred_check_branch
      %391 = sbr.rel (%p388) target = $region12
    $region11: #{custom_bert_forward.1} parent=5 // pred_region
      %s392 = ssub.s32 %s24, 1
    $region12: #{custom_bert_forward.1} parent=5 // pred_fallthru
      _
    %p393 = scmp.lt.s32.totalorder %s24, 6
    // Predicated region
    $region13: #{custom_bert_forward.1} parent=5 // pred_check
      %p394 = pneg %p393
    $region14: #{custom_bert_forward.1} parent=5 // pred_check_branch
      %396 = sbr.rel (%p394) target = $region16
    $region15: #{custom_bert_forward.1} parent=5 // pred_region
      // Predicated region
      $region17: #{custom_bert_forward.1} parent=15 // pred_check
        %p397 = pneg %p56
      $region18: #{custom_bert_forward.1} parent=15 // pred_check_branch
        %399 = sbr.rel (%p397) target = $region20
      $region19: #{custom_bert_forward.1} parent=15 // pred_region
        %p400 = scmp.lt.s32.totalorder %s31, 2
        %s401 = scalar_select %p400, %s31, 2
        %s402 = smul.addr %s401, 2
        %s403 = smul.addr %s402, 8
        %s404 = scalar_lea.vmem %s1, %s403
      $region20: #{custom_bert_forward.1} parent=15 // pred_fallthru
        _
      // Predicated region
      $region21: #{custom_bert_forward.1} parent=15 // pred_check
        %p405 = pneg %p82
      $region22: #{custom_bert_forward.1} parent=15 // pred_check_branch
        %407 = sbr.rel (%p405) target = $region24
      $region23: #{custom_bert_forward.1} parent=15 // pred_region
        %p408 = scmp.lt.s32.totalorder %s31, 2
        %s409 = scalar_select %p408, %s31, 2
        %s410 = smul.addr %s409, 2
        %s411 = scalar_lea.vmem %s2, %s410
      $region24: #{custom_bert_forward.1} parent=15 // pred_fallthru
        _
      // Predicated region
      $region25: #{custom_bert_forward.1} parent=15 // pred_check
        %p412 = pneg %p108
      $region26: #{custom_bert_forward.1} parent=15 // pred_check_branch
        %414 = sbr.rel (%p412) target = $region28
      $region27: #{custom_bert_forward.1} parent=15 // pred_region
        %p415 = scmp.lt.s32.totalorder %s31, 2
        %s416 = scalar_select %p415, %s31, 2
        %s417 = smul.addr %s416, 2
        %s418 = smul.addr %s417, 8
        %s419 = scalar_lea.vmem %s3, %s418
      $region28: #{custom_bert_forward.1} parent=15 // pred_fallthru
        _
      // Predicated region
      $region29: #{custom_bert_forward.1} parent=15 // pred_check
        %p420 = pneg %p136
      $region30: #{custom_bert_forward.1} parent=15 // pred_check_branch
        %422 = sbr.rel (%p420) target = $region32
      $region31: #{custom_bert_forward.1} parent=15 // pred_region
        %s423 = sld [smem:[#allocation4 + %s31]]
        %p424 = scmp.lt.s32.totalorder %s423, 1
        %s425 = scalar_select %p424, %s423, 1
        %s426 = smul.addr %s425, 2
        %s427 = scalar_lea.vmem %s4, %s426
        %s428 = sld [smem:[#allocation4 + %s31]]
      $region32: #{custom_bert_forward.1} parent=15 // pred_fallthru
        _
      // Predicated region
      $region33: #{custom_bert_forward.1} parent=15 // pred_check
        %p429 = pneg %p166
      $region34: #{custom_bert_forward.1} parent=15 // pred_check_branch
        %431 = sbr.rel (%p429) target = $region36
      $region35: #{custom_bert_forward.1} parent=15 // pred_region
        %s432 = sld [smem:[#allocation4 + %s31]]
        %p433 = scmp.lt.s32.totalorder %s432, 1
        %s434 = scalar_select %p433, %s432, 1
        %p435 = scmp.lt.s32.totalorder %s32, 1
        %s436 = scalar_select %p435, %s32, 1
        %s437 = smul.addr %s436, 4
        %s438 = smul.addr %s434, 8
        %s439 = sadd.s32 %s437, %s438
        %s440 = smul.addr %s439, 4
        %s441 = scalar_lea.vmem %s5, %s440
        %s442 = sld [smem:[#allocation4 + %s31]]
      $region36: #{custom_bert_forward.1} parent=15 // pred_fallthru
        _
      // Predicated region
      $region37: #{custom_bert_forward.1} parent=15 // pred_check
        %p443 = pneg %p196
      $region38: #{custom_bert_forward.1} parent=15 // pred_check_branch
        %445 = sbr.rel (%p443) target = $region40
      $region39: #{custom_bert_forward.1} parent=15 // pred_region
        %s446 = sld [smem:[#allocation4 + %s31]]
        %p447 = scmp.lt.s32.totalorder %s446, 1
        %s448 = scalar_select %p447, %s446, 1
        %p449 = scmp.lt.s32.totalorder %s32, 1
        %s450 = scalar_select %p449, %s32, 1
        %s451 = smul.addr %s448, 2
        %s452 = sadd.s32 %s450, %s451
        %s453 = scalar_lea.vmem %s6, %s452
        %s454 = sld [smem:[#allocation4 + %s31]]
      $region40: #{custom_bert_forward.1} parent=15 // pred_fallthru
        _
      // Predicated region
      $region41: #{custom_bert_forward.1} parent=15 // pred_check
        %p455 = pneg %p226
      $region42: #{custom_bert_forward.1} parent=15 // pred_check_branch
        %457 = sbr.rel (%p455) target = $region44
      $region43: #{custom_bert_forward.1} parent=15 // pred_region
        %s458 = sld [smem:[#allocation4 + %s31]]
        %p459 = scmp.lt.s32.totalorder %s458, 1
        %s460 = scalar_select %p459, %s458, 1
        %p461 = scmp.lt.s32.totalorder %s32, 1
        %s462 = scalar_select %p461, %s32, 1
        %s463 = smul.addr %s462, 4
        %s464 = smul.addr %s460, 8
        %s465 = sadd.s32 %s463, %s464
        %s466 = smul.addr %s465, 4
        %s467 = scalar_lea.vmem %s7, %s466
        %s468 = sld [smem:[#allocation4 + %s31]]
      $region44: #{custom_bert_forward.1} parent=15 // pred_fallthru
        _
      // Predicated region
      $region45: #{custom_bert_forward.1} parent=15 // pred_check
        %p469 = pneg %p256
      $region46: #{custom_bert_forward.1} parent=15 // pred_check_branch
        %471 = sbr.rel (%p469) target = $region48
      $region47: #{custom_bert_forward.1} parent=15 // pred_region
        %s472 = sld [smem:[#allocation4 + %s31]]
        %p473 = scmp.lt.s32.totalorder %s472, 1
        %s474 = scalar_select %p473, %s472, 1
        %p475 = scmp.lt.s32.totalorder %s32, 1
        %s476 = scalar_select %p475, %s32, 1
        %s477 = smul.addr %s476, 4
        %s478 = smul.addr %s474, 8
        %s479 = sadd.s32 %s477, %s478
        %s480 = smul.addr %s479, 4
        %s481 = scalar_lea.vmem %s8, %s480
        %s482 = sld [smem:[#allocation4 + %s31]]
      $region48: #{custom_bert_forward.1} parent=15 // pred_fallthru
        _
      // Predicated region
      $region49: #{custom_bert_forward.1} parent=15 // pred_check
        %p483 = pneg %p286
      $region50: #{custom_bert_forward.1} parent=15 // pred_check_branch
        %485 = sbr.rel (%p483) target = $region52
      $region51: #{custom_bert_forward.1} parent=15 // pred_region
        %s486 = sld [smem:[#allocation4 + %s31]]
        %p487 = scmp.lt.s32.totalorder %s486, 1
        %s488 = scalar_select %p487, %s486, 1
        %p489 = scmp.lt.s32.totalorder %s32, 1
        %s490 = scalar_select %p489, %s32, 1
        %s491 = smul.addr %s488, 2
        %s492 = sadd.s32 %s490, %s491
        %s493 = scalar_lea.vmem %s9, %s492
        %s494 = sld [smem:[#allocation4 + %s31]]
      $region52: #{custom_bert_forward.1} parent=15 // pred_fallthru
        _
      // Predicated region
      $region53: #{custom_bert_forward.1} parent=15 // pred_check
        %p495 = pneg %p316
      $region54: #{custom_bert_forward.1} parent=15 // pred_check_branch
        %497 = sbr.rel (%p495) target = $region56
      $region55: #{custom_bert_forward.1} parent=15 // pred_region
        %s498 = sld [smem:[#allocation4 + %s31]]
        %p499 = scmp.lt.s32.totalorder %s498, 1
        %s500 = scalar_select %p499, %s498, 1
        %p501 = scmp.lt.s32.totalorder %s32, 1
        %s502 = scalar_select %p501, %s32, 1
        %s503 = smul.addr %s502, 8
        %s504 = smul.addr %s500, 16
        %s505 = sadd.s32 %s503, %s504
        %s506 = smul.addr %s505, 4
        %s507 = scalar_lea.vmem %s10, %s506
        %s508 = sld [smem:[#allocation4 + %s31]]
      $region56: #{custom_bert_forward.1} parent=15 // pred_fallthru
        _
      // Predicated region
      $region57: #{custom_bert_forward.1} parent=15 // pred_check
        %p509 = pneg %p346
      $region58: #{custom_bert_forward.1} parent=15 // pred_check_branch
        %511 = sbr.rel (%p509) target = $region60
      $region59: #{custom_bert_forward.1} parent=15 // pred_region
        %s512 = sld [smem:[#allocation4 + %s31]]
        %p513 = scmp.lt.s32.totalorder %s512, 1
        %s514 = scalar_select %p513, %s512, 1
        %p515 = scmp.lt.s32.totalorder %s32, 1
        %s516 = scalar_select %p515, %s32, 1
        %s517 = smul.addr %s514, 2
        %s518 = sadd.s32 %s516, %s517
        %s519 = smul.addr %s518, 8
        %s520 = scalar_lea.vmem %s11, %s519
        %s521 = sld [smem:[#allocation4 + %s31]]
      $region60: #{custom_bert_forward.1} parent=15 // pred_fallthru
        _
    $region16: #{custom_bert_forward.1} parent=5 // pred_fallthru
      _
    %p522 = scmp.le.s32.totalorder 1, %s24
    %p523 = scmp.lt.s32.totalorder %s24, 7
    %p524 = pnand %p522, %p523
    %p525 = pneg %p524
    // Predicated region
    $region61: #{custom_bert_forward.1} parent=5 // pred_check
      _
    $region62: #{custom_bert_forward.1} parent=5 // pred_check_branch
      %527 = sbr.rel (%p524) target = $region64
    $region63: #{custom_bert_forward.1} parent=5 // pred_region
      %s528 = ssub.s32 %s24, 1
      %p529 = scmp.lt.s32.totalorder %s33, 2
      %s530 = scalar_select %p529, %s33, 2
      %s531 = smul.addr %s530, 2
      %s532 = smul.addr %s531, 8
      %s533 = scalar_lea.vmem %s1, %s532
      %p534 = pneg %p62
      %p535 = pneg %p59
      %p536 = scmp.lt.s32.totalorder %s33, 2
      %s537 = scalar_select %p536, %s33, 2
      %s538 = smul.addr %s537, 2
      %s539 = scalar_lea.vmem %s2, %s538
      %p540 = pneg %p88
      %p541 = pneg %p85
      %p542 = scmp.lt.s32.totalorder %s33, 2
      %s543 = scalar_select %p542, %s33, 2
      %s544 = smul.addr %s543, 2
      %s545 = smul.addr %s544, 8
      %s546 = scalar_lea.vmem %s3, %s545
      %p547 = pneg %p114
      %p548 = pneg %p111
      %s549 = sld [smem:[#allocation4 + %s33]]
      %p550 = scmp.lt.s32.totalorder %s549, 1
      %s551 = scalar_select %p550, %s549, 1
      %s552 = smul.addr %s551, 2
      %s553 = scalar_lea.vmem %s4, %s552
      %p554 = pneg %p142
      %p555 = pneg %p139
      %s556 = sld [smem:[#allocation4 + %s33]]
      %p557 = scmp.lt.s32.totalorder %s556, 1
      %s558 = scalar_select %p557, %s556, 1
      %p559 = scmp.lt.s32.totalorder %s34, 1
      %s560 = scalar_select %p559, %s34, 1
      %s561 = smul.addr %s560, 4
      %s562 = smul.addr %s558, 8
      %s563 = sadd.s32 %s561, %s562
      %s564 = smul.addr %s563, 4
      %s565 = scalar_lea.vmem %s5, %s564
      %p566 = pneg %p172
      %p567 = pneg %p169
      %s568 = sld [smem:[#allocation4 + %s33]]
      %p569 = scmp.lt.s32.totalorder %s568, 1
      %s570 = scalar_select %p569, %s568, 1
      %p571 = scmp.lt.s32.totalorder %s34, 1
      %s572 = scalar_select %p571, %s34, 1
      %s573 = smul.addr %s570, 2
      %s574 = sadd.s32 %s572, %s573
      %s575 = scalar_lea.vmem %s6, %s574
      %p576 = pneg %p202
      %p577 = pneg %p199
      %s578 = sld [smem:[#allocation4 + %s33]]
      %p579 = scmp.lt.s32.totalorder %s578, 1
      %s580 = scalar_select %p579, %s578, 1
      %p581 = scmp.lt.s32.totalorder %s34, 1
      %s582 = scalar_select %p581, %s34, 1
      %s583 = smul.addr %s582, 4
      %s584 = smul.addr %s580, 8
      %s585 = sadd.s32 %s583, %s584
      %s586 = smul.addr %s585, 4
      %s587 = scalar_lea.vmem %s7, %s586
      %p588 = pneg %p232
      %p589 = pneg %p229
      %s590 = sld [smem:[#allocation4 + %s33]]
      %p591 = scmp.lt.s32.totalorder %s590, 1
      %s592 = scalar_select %p591, %s590, 1
      %p593 = scmp.lt.s32.totalorder %s34, 1
      %s594 = scalar_select %p593, %s34, 1
      %s595 = smul.addr %s594, 4
      %s596 = smul.addr %s592, 8
      %s597 = sadd.s32 %s595, %s596
      %s598 = smul.addr %s597, 4
      %s599 = scalar_lea.vmem %s8, %s598
      %p600 = pneg %p262
      %p601 = pneg %p259
      %s602 = sld [smem:[#allocation4 + %s33]]
      %p603 = scmp.lt.s32.totalorder %s602, 1
      %s604 = scalar_select %p603, %s602, 1
      %p605 = scmp.lt.s32.totalorder %s34, 1
      %s606 = scalar_select %p605, %s34, 1
      %s607 = smul.addr %s604, 2
      %s608 = sadd.s32 %s606, %s607
      %s609 = scalar_lea.vmem %s9, %s608
      %p610 = pneg %p292
      %p611 = pneg %p289
      %s612 = sld [smem:[#allocation4 + %s33]]
      %p613 = scmp.lt.s32.totalorder %s612, 1
      %s614 = scalar_select %p613, %s612, 1
      %p615 = scmp.lt.s32.totalorder %s34, 1
      %s616 = scalar_select %p615, %s34, 1
      %s617 = smul.addr %s616, 8
      %s618 = smul.addr %s614, 16
      %s619 = sadd.s32 %s617, %s618
      %s620 = smul.addr %s619, 4
      %s621 = scalar_lea.vmem %s10, %s620
      %p622 = pneg %p322
      %p623 = pneg %p319
      %s624 = sld [smem:[#allocation4 + %s33]]
      %p625 = scmp.lt.s32.totalorder %s624, 1
      %s626 = scalar_select %p625, %s624, 1
      %p627 = scmp.lt.s32.totalorder %s34, 1
      %s628 = scalar_select %p627, %s34, 1
      %s629 = smul.addr %s626, 2
      %s630 = sadd.s32 %s628, %s629
      %s631 = smul.addr %s630, 8
      %s632 = scalar_lea.vmem %s11, %s631
      %p633 = pneg %p352
      %p634 = pneg %p349
      %p635 = pneg %p378
      %p636 = pneg %p375
      %p637 = scmp.lt.s32.totalorder %s33, 2
      %s638 = scalar_select %p637, %s33, 2
      %s639 = smul.addr %s638, 2
      %s640 = scalar_lea.vmem %s12, %s639
      %p641 = scmp.lt.s32.totalorder %s33, 2
      %s642 = scalar_select %p641, %s33, 2
      %s643 = smul.addr %s642, 2
      %s644 = smul.addr %s643, 8
      %s645 = scalar_lea.vmem %s1, %s644
      %p646 = scmp.lt.s32.totalorder %s33, 2
      %s647 = scalar_select %p646, %s33, 2
      %s648 = smul.addr %s647, 2
      %s649 = scalar_lea.vmem %s2, %s648
      %p650 = scmp.lt.s32.totalorder %s33, 2
      %s651 = scalar_select %p650, %s33, 2
      %s652 = smul.addr %s651, 2
      %s653 = smul.addr %s652, 8
      %s654 = scalar_lea.vmem %s3, %s653
      %s655 = sld [smem:[#allocation4 + %s33]]
      %p656 = scmp.lt.s32.totalorder %s655, 1
      %s657 = scalar_select %p656, %s655, 1
      %s658 = smul.addr %s657, 2
      %s659 = scalar_lea.vmem %s4, %s658
      %s660 = sld [smem:[#allocation4 + %s33]]
      %s661 = sld [smem:[#allocation4 + %s33]]
      %p662 = scmp.lt.s32.totalorder %s661, 1
      %s663 = scalar_select %p662, %s661, 1
      %p664 = scmp.lt.s32.totalorder %s34, 1
      %s665 = scalar_select %p664, %s34, 1
      %s666 = smul.addr %s665, 4
      %s667 = smul.addr %s663, 8
      %s668 = sadd.s32 %s666, %s667
      %s669 = smul.addr %s668, 4
      %s670 = scalar_lea.vmem %s5, %s669
      %s671 = sld [smem:[#allocation4 + %s33]]
      %s672 = sld [smem:[#allocation4 + %s33]]
      %p673 = scmp.lt.s32.totalorder %s672, 1
      %s674 = scalar_select %p673, %s672, 1
      %p675 = scmp.lt.s32.totalorder %s34, 1
      %s676 = scalar_select %p675, %s34, 1
      %s677 = smul.addr %s674, 2
      %s678 = sadd.s32 %s676, %s677
      %s679 = scalar_lea.vmem %s6, %s678
      %s680 = sld [smem:[#allocation4 + %s33]]
      %s681 = sld [smem:[#allocation4 + %s33]]
      %p682 = scmp.lt.s32.totalorder %s681, 1
      %s683 = scalar_select %p682, %s681, 1
      %p684 = scmp.lt.s32.totalorder %s34, 1
      %s685 = scalar_select %p684, %s34, 1
      %s686 = smul.addr %s685, 4
      %s687 = smul.addr %s683, 8
      %s688 = sadd.s32 %s686, %s687
      %s689 = smul.addr %s688, 4
      %s690 = scalar_lea.vmem %s7, %s689
      %s691 = sld [smem:[#allocation4 + %s33]]
      %s692 = sld [smem:[#allocation4 + %s33]]
      %p693 = scmp.lt.s32.totalorder %s692, 1
      %s694 = scalar_select %p693, %s692, 1
      %p695 = scmp.lt.s32.totalorder %s34, 1
      %s696 = scalar_select %p695, %s34, 1
      %s697 = smul.addr %s696, 4
      %s698 = smul.addr %s694, 8
      %s699 = sadd.s32 %s697, %s698
      %s700 = smul.addr %s699, 4
      %s701 = scalar_lea.vmem %s8, %s700
      %s702 = sld [smem:[#allocation4 + %s33]]
      %s703 = sld [smem:[#allocation4 + %s33]]
      %p704 = scmp.lt.s32.totalorder %s703, 1
      %s705 = scalar_select %p704, %s703, 1
      %p706 = scmp.lt.s32.totalorder %s34, 1
      %s707 = scalar_select %p706, %s34, 1
      %s708 = smul.addr %s705, 2
      %s709 = sadd.s32 %s707, %s708
      %s710 = scalar_lea.vmem %s9, %s709
      %s711 = sld [smem:[#allocation4 + %s33]]
      %s712 = sld [smem:[#allocation4 + %s33]]
      %p713 = scmp.lt.s32.totalorder %s712, 1
      %s714 = scalar_select %p713, %s712, 1
      %p715 = scmp.lt.s32.totalorder %s34, 1
      %s716 = scalar_select %p715, %s34, 1
      %s717 = smul.addr %s716, 8
      %s718 = smul.addr %s714, 16
      %s719 = sadd.s32 %s717, %s718
      %s720 = smul.addr %s719, 4
      %s721 = scalar_lea.vmem %s10, %s720
      %s722 = sld [smem:[#allocation4 + %s33]]
      %s723 = sld [smem:[#allocation4 + %s33]]
      %p724 = scmp.lt.s32.totalorder %s723, 1
      %s725 = scalar_select %p724, %s723, 1
      %p726 = scmp.lt.s32.totalorder %s34, 1
      %s727 = scalar_select %p726, %s34, 1
      %s728 = smul.addr %s725, 2
      %s729 = sadd.s32 %s727, %s728
      %s730 = smul.addr %s729, 8
      %s731 = scalar_lea.vmem %s11, %s730
      %s732 = sld [smem:[#allocation4 + %s33]]
      %p733 = scmp.lt.s32.totalorder %s33, 2
      %s734 = scalar_select %p733, %s33, 2
      %s735 = smul.addr %s734, 2
      %s736 = scalar_lea.vmem %s12, %s735
      %p738 = scmp.eq.s32.totalorder %s34, 0
      // Predicated region
      $region65: #{custom_bert_forward.1} parent=63 // pred_check
        %p739 = pneg %p738
      $region66: #{custom_bert_forward.1} parent=63 // pred_check_branch
        %741 = sbr.rel (%p739) target = $region68
      $region67: #{custom_bert_forward.1} parent=63 // pred_region
        %v742 = vld [vmem:[%s645] sm:$0xff]
        %v743 = vld [vmem:[%s645 + $0x8] sm:$0xff]
        %v744 = vld [vmem:[%s659] sm:$0x1]
        %v745 = vld [vmem:[%s659 + $0x1] sm:$0x1]
        %vm746 = vcmask 261120
        %v747 = vsel %vm746, %v742, 0.0
        %748 = vadd.xlane.f32.xlu0 %v747
        %v749 = vpop.xlane.xlu0 %748
        %v750 = vsel %vm746, %v743, 0.0
        %751 = vadd.xlane.f32.xlu0 %v750
        %v752 = vpop.xlane.xlu0 %751
        %v753 = vrcp.pop 32.0
        %v754 = vmul.f32 %v749, %v753
        %v755 = vmul.f32 %v752, %v753
        %v756 = vsub.f32 %v742, %v754
        %v757 = vsub.f32 %v743, %v755
        %v758 = vmul.f32 %v756, %v756
        %v759 = vmul.f32 %v757, %v757
        %v760 = vsel %vm746, %v758, 0.0
        %761 = vadd.xlane.f32.xlu0 %v760
        %v762 = vpop.xlane.xlu0 %761
        %v763 = vsel %vm746, %v759, 0.0
        %764 = vadd.xlane.f32.xlu0 %v763
        %v765 = vpop.xlane.xlu0 %764
        %v766 = vmul.f32 %v762, %v753
        %v767 = vmul.f32 %v765, %v753
        %v768 = vadd.f32 %v766, 1e-12
        %v769 = vadd.f32 %v767, 1e-12
        %v770 = vrsqrt.pop %v768
        %v771 = vrsqrt.pop %v769
        %v772 = vmul.f32 %v756, %v770
        %v773 = vmul.f32 %v757, %v771
        %v774 = vlaneseq
        %v775 = vshrl.u32 %v774, 7
        %v776 = vsub.s32 0, %v775
        %v777 = vrot.slane %v744, %v776
        %v778 = vmul.f32 %v772, %v777
        %v779 = vmul.f32 %v773, %v777
        %v780 = vlaneseq
        %v781 = vshrl.u32 %v780, 7
        %v782 = vsub.s32 0, %v781
        %v783 = vrot.slane %v745, %v782
        %v784 = vadd.f32 %v778, %v783
        %v785 = vadd.f32 %v779, %v783
        %786 = vst.msk [vmem:[#allocation2] sm:$0xff] %vm746, %v784
        %787 = vst.msk [vmem:[#allocation2 + $0x8] sm:$0xff] %vm746, %v785
      $region68: #{custom_bert_forward.1} parent=63 // pred_fallthru
        _
      %v788 = vld [vmem:[#allocation2] sm:$0xff]
      %v789 = vld [vmem:[#allocation2 + $0x8] sm:$0xff]
      %v790 = vld [vmem:[%s649] sm:$0x1]
      %v791 = vld [vmem:[%s649 + $0x1] sm:$0x1]
      %v792 = vld [vmem:[%s731] sm:$0x3f]
      %v793 = vpack.c.bf16 %v789, %v788
      %v794 = vld [vmem:[%s670] sm:$0xf]
      %v795 = vld [vmem:[%s670 + $0x4] sm:$0xf]
      %v796 = vld [vmem:[%s670 + $0x8] sm:$0xf]
      %v797 = vld [vmem:[%s670 + $0xc] sm:$0xf]
      %v798 = vld [vmem:[%s679] sm:$0x1]
      %v800 = vlaneseq
      %v801 = vshrl.u32 %v800, 7
      %v802 = vsub.s32 0, %v801
      %v803 = vrot.slane %v798, %v802
      %v809 = vunpack.c.l.b16 %v794
      %v810 = vunpack.c.l.b16 %v795
      %v811 = vunpack.c.l.b16 %v796
      %v812 = vunpack.c.l.b16 %v797
      %v813 = vpack.c.b16 %v810, %v809
      %v814 = vpack.c.b16 %v812, %v811
      %vm817 = vcmask 261120
      %v819 = vsel %vm817, %v793, 0
      %821 = vmatprep.subr.bf16.mxu0 0
      %822 = vmatpush1.bf16.msra.mxu0 0
      %823 = vmatprep.subr.bf16.mxu0 0
      %824 = vmatpush1.bf16.msra.mxu0 0
      %825 = vmatprep.subr.bf16.mxu0 0
      %826 = vmatpush1.bf16.msra.mxu0 0
      %827 = vmatprep.subr.bf16.mxu0 0
      %828 = vmatpush1.bf16.msra.mxu0 0
      %829 = vmatprep.subr.bf16.mxu0 0
      %830 = vmatpush1.bf16.msra.mxu0 0
      %831 = vmatprep.subr.bf16.mxu0 0
      %832 = vmatpush1.bf16.msra.mxu0 0
      %833 = vmatprep.subr.bf16.mxu0 0
      %834 = vmatpush1.bf16.msra.mxu0 %v814
      %835 = vmatprep.subr.bf16.mxu0 0
      %836 = vmatpush1.bf16.msra.mxu0 %v813
      %837 = vmatprep.subr.bf16.mxu0 0
      %838 = vmatpush2.bf16.msra.mxu0 0
      %839 = vmatprep.subr.bf16.mxu0 0
      %840 = vmatpush2.bf16.msra.mxu0 0
      %841 = vmatprep.subr.bf16.mxu0 0
      %842 = vmatpush2.bf16.msra.mxu0 0
      %843 = vmatprep.subr.bf16.mxu0 0
      %844 = vmatpush2.bf16.msra.mxu0 0
      %845 = vmatprep.subr.bf16.mxu0 0
      %846 = vmatpush2.bf16.msra.mxu0 0
      %847 = vmatprep.subr.bf16.mxu0 0
      %848 = vmatpush2.bf16.msra.mxu0 0
      %849 = vmatprep.subr.bf16.mxu0 0
      %850 = vmatpush2.bf16.msra.mxu0 0
      %851 = vmatprep.subr.bf16.mxu0 0
      %852 = vmatpush2.bf16.msra.mxu0 0
      %853 = vmatprep.mubr.bf16.mxu0 0
      %854 = vmatmul.mubr.bf16.gmra.mxu0 %v819
      %v855 = vpop.f32.mrf.mxu0
      %v856 = vadd.f32 %v803, %v855
      %v857 = vpop.f32.mrf.mxu0
      %v858 = vpop.f32.mrf.mxu0
      %v859 = vadd.f32 %v803, %v858
      %v860 = vpop.f32.mrf.mxu0
      %861 = vdwg.mxu0
      %v862 = vpack.c.bf16 %v856, %v856
      %v863 = vpack.c.bf16 %v859, %v859
      %865 = vrot.lane.b32.xlu0 %v862, 96
      %v866 = vpop.permute.xlu0 %865
      %vm867 = vcmask 130048
      %v869 = vsel %vm867, %v862, 0
      %v872 = vsel %vm867, %v866, 0
      %874 = vmatprep.subr.bf16.mxu0 0
      %875 = vmatpush1.bf16.xpose.msra.mxu0 0
      %876 = vmatprep.subr.bf16.mxu0 0
      %877 = vmatpush1.bf16.xpose.msra.mxu0 0
      %878 = vmatprep.subr.bf16.mxu0 0
      %879 = vmatpush1.bf16.xpose.msra.mxu0 0
      %880 = vmatprep.subr.bf16.mxu0 0
      %881 = vmatpush1.bf16.xpose.msra.mxu0 0
      %882 = vmatprep.subr.bf16.mxu0 0
      %883 = vmatpush1.bf16.xpose.msra.mxu0 0
      %884 = vmatprep.subr.bf16.mxu0 0
      %885 = vmatpush1.bf16.xpose.msra.mxu0 0
      %886 = vmatprep.subr.bf16.mxu0 0
      %887 = vmatpush1.bf16.xpose.msra.mxu0 0
      %888 = vmatprep.subr.bf16.mxu0 0
      %889 = vmatpush1.bf16.xpose.msra.mxu0 %v872
      %890 = vmatprep.subr.bf16.mxu0 0
      %891 = vmatpush2.bf16.xpose.msra.mxu0 0
      %892 = vmatprep.subr.bf16.mxu0 0
      %893 = vmatpush2.bf16.xpose.msra.mxu0 0
      %894 = vmatprep.subr.bf16.mxu0 0
      %895 = vmatpush2.bf16.xpose.msra.mxu0 0
      %896 = vmatprep.subr.bf16.mxu0 0
      %897 = vmatpush2.bf16.xpose.msra.mxu0 0
      %898 = vmatprep.subr.bf16.mxu0 0
      %899 = vmatpush2.bf16.xpose.msra.mxu0 0
      %900 = vmatprep.subr.bf16.mxu0 0
      %901 = vmatpush2.bf16.xpose.msra.mxu0 0
      %902 = vmatprep.subr.bf16.mxu0 0
      %903 = vmatpush2.bf16.xpose.msra.mxu0 0
      %904 = vmatprep.subr.bf16.mxu0 0
      %905 = vmatpush2.bf16.xpose.msra.mxu0 0
      %906 = vmatprep.mubr.bf16.mxu0 0
      %907 = vmatmul.mubr.bf16.gmra.mxu0 %v869
      %v908 = vpop.f32.mrf.mxu0
      %v909 = vadd.f32 0.0, %v908
      %v910 = vpop.f32.mrf.mxu0
      %v911 = vpop.f32.mrf.mxu0
      %v912 = vpop.f32.mrf.mxu0
      %913 = vdwg.mxu0
      %915 = vrot.lane.b32.xlu0 %v863, 96
      %v916 = vpop.permute.xlu0 %915
      %v918 = vsel %vm867, %v863, 0
      %v921 = vsel %vm867, %v916, 0
      %923 = vmatprep.subr.bf16.mxu0 0
      %924 = vmatpush1.bf16.xpose.msra.mxu0 0
      %925 = vmatprep.subr.bf16.mxu0 0
      %926 = vmatpush1.bf16.xpose.msra.mxu0 0
      %927 = vmatprep.subr.bf16.mxu0 0
      %928 = vmatpush1.bf16.xpose.msra.mxu0 0
      %929 = vmatprep.subr.bf16.mxu0 0
      %930 = vmatpush1.bf16.xpose.msra.mxu0 0
      %931 = vmatprep.subr.bf16.mxu0 0
      %932 = vmatpush1.bf16.xpose.msra.mxu0 0
      %933 = vmatprep.subr.bf16.mxu0 0
      %934 = vmatpush1.bf16.xpose.msra.mxu0 0
      %935 = vmatprep.subr.bf16.mxu0 0
      %936 = vmatpush1.bf16.xpose.msra.mxu0 0
      %937 = vmatprep.subr.bf16.mxu0 0
      %938 = vmatpush1.bf16.xpose.msra.mxu0 %v921
      %939 = vmatprep.subr.bf16.mxu0 0
      %940 = vmatpush2.bf16.xpose.msra.mxu0 0
      %941 = vmatprep.subr.bf16.mxu0 0
      %942 = vmatpush2.bf16.xpose.msra.mxu0 0
      %943 = vmatprep.subr.bf16.mxu0 0
      %944 = vmatpush2.bf16.xpose.msra.mxu0 0
      %945 = vmatprep.subr.bf16.mxu0 0
      %946 = vmatpush2.bf16.xpose.msra.mxu0 0
      %947 = vmatprep.subr.bf16.mxu0 0
      %948 = vmatpush2.bf16.xpose.msra.mxu0 0
      %949 = vmatprep.subr.bf16.mxu0 0
      %950 = vmatpush2.bf16.xpose.msra.mxu0 0
      %951 = vmatprep.subr.bf16.mxu0 0
      %952 = vmatpush2.bf16.xpose.msra.mxu0 0
      %953 = vmatprep.subr.bf16.mxu0 0
      %954 = vmatpush2.bf16.xpose.msra.mxu0 0
      %955 = vmatprep.mubr.bf16.mxu0 0
      %956 = vmatmul.mubr.bf16.gmra.mxu0 %v918
      %v957 = vpop.f32.mrf.mxu0
      %v958 = vadd.f32 0.0, %v957
      %v959 = vpop.f32.mrf.mxu0
      %v960 = vpop.f32.mrf.mxu0
      %v961 = vpop.f32.mrf.mxu0
      %962 = vdwg.mxu0
      %v963 = vmul.f32 %v909, 0.25
      %v964 = vmul.f32 %v958, 0.25
      %v967 = vlaneseq
      %v968 = vshrl.u32 %v967, 7
      %v969 = vsub.s32 0, %v968
      %v970 = vrot.slane %v790, %v969
      %v971 = vlaneseq
      %v972 = vshrl.u32 %v971, 7
      %v973 = vsub.s32 0, %v972
      %v974 = vrot.slane %v791, %v973
      %v977 = vadd.f32 %v963, %v970
      %v978 = vadd.f32 %v964, %v974
      %vm979 = vcmask 64512
      %v980 = vsel %vm979, %v977, -inf
      %981 = vmax.xlane.f32.xlu0 %v980
      %v982 = vpop.xlane.xlu0 %981
      %v983 = vsel %vm979, %v978, -inf
      %984 = vmax.xlane.f32.xlu0 %v983
      %v985 = vpop.xlane.xlu0 %984
      %v986 = vsub.f32 %v977, %v982
      %v987 = vsub.f32 %v978, %v985
      %v988 = vmul.f32 %v986, 1.442695
      %v989 = vpow.pop %v988
      %v990 = vmul.f32 %v987, 1.442695
      %v991 = vpow.pop %v990
      %v992 = vsel %vm979, %v989, 0.0
      %993 = vadd.xlane.f32.xlu0 %v992
      %v994 = vpop.xlane.xlu0 %993
      %v995 = vsel %vm979, %v991, 0.0
      %996 = vadd.xlane.f32.xlu0 %v995
      %v997 = vpop.xlane.xlu0 %996
      %v998 = vrcp.pop %v994
      %v999 = vrcp.pop %v997
      %v1000 = vmul.f32 %v989, %v998
      %v1001 = vmul.f32 %v991, %v999
      %v1002 = vpack.c.bf16 %v1000, %v1000
      %v1003 = vpack.c.bf16 %v1001, %v1001
      %1004 = vrot.lane.b32.xlu0 %v862, 64
      %v1005 = vpop.permute.xlu0 %1004
      %v1007 = vsel %vm979, %v1002, 0
      %vm1009 = vcmask 1043456
      %v1011 = vsel %vm1009, %v1005, 0
      %1013 = vmatprep.subr.bf16.mxu0 0
      %1014 = vmatpush1.bf16.msra.mxu0 0
      %1015 = vmatprep.subr.bf16.mxu0 0
      %1016 = vmatpush1.bf16.msra.mxu0 0
      %1017 = vmatprep.subr.bf16.mxu0 0
      %1018 = vmatpush1.bf16.msra.mxu0 0
      %1019 = vmatprep.subr.bf16.mxu0 0
      %1020 = vmatpush1.bf16.msra.mxu0 0
      %1021 = vmatprep.subr.bf16.mxu0 0
      %1022 = vmatpush1.bf16.msra.mxu0 0
      %1023 = vmatprep.subr.bf16.mxu0 0
      %1024 = vmatpush1.bf16.msra.mxu0 0
      %1025 = vmatprep.subr.bf16.mxu0 0
      %1026 = vmatpush1.bf16.msra.mxu0 0
      %1027 = vmatprep.subr.bf16.mxu0 0
      %1028 = vmatpush1.bf16.msra.mxu0 %v1011
      %1029 = vmatprep.subr.bf16.mxu0 0
      %1030 = vmatpush2.bf16.msra.mxu0 0
      %1031 = vmatprep.subr.bf16.mxu0 0
      %1032 = vmatpush2.bf16.msra.mxu0 0
      %1033 = vmatprep.subr.bf16.mxu0 0
      %1034 = vmatpush2.bf16.msra.mxu0 0
      %1035 = vmatprep.subr.bf16.mxu0 0
      %1036 = vmatpush2.bf16.msra.mxu0 0
      %1037 = vmatprep.subr.bf16.mxu0 0
      %1038 = vmatpush2.bf16.msra.mxu0 0
      %1039 = vmatprep.subr.bf16.mxu0 0
      %1040 = vmatpush2.bf16.msra.mxu0 0
      %1041 = vmatprep.subr.bf16.mxu0 0
      %1042 = vmatpush2.bf16.msra.mxu0 0
      %1043 = vmatprep.subr.bf16.mxu0 0
      %1044 = vmatpush2.bf16.msra.mxu0 0
      %1045 = vmatprep.mubr.bf16.mxu0 0
      %1046 = vmatmul.mubr.bf16.gmra.mxu0 %v1007
      %v1047 = vpop.f32.mrf.mxu0
      %v1048 = vadd.f32 0.0, %v1047
      %v1049 = vpop.f32.mrf.mxu0
      %v1050 = vpop.f32.mrf.mxu0
      %v1051 = vpop.f32.mrf.mxu0
      %1052 = vdwg.mxu0
      %1053 = vrot.lane.b32.xlu0 %v863, 64
      %v1054 = vpop.permute.xlu0 %1053
      %v1056 = vsel %vm979, %v1003, 0
      %v1059 = vsel %vm1009, %v1054, 0
      %1061 = vmatprep.subr.bf16.mxu0 0
      %1062 = vmatpush1.bf16.msra.mxu0 0
      %1063 = vmatprep.subr.bf16.mxu0 0
      %1064 = vmatpush1.bf16.msra.mxu0 0
      %1065 = vmatprep.subr.bf16.mxu0 0
      %1066 = vmatpush1.bf16.msra.mxu0 0
      %1067 = vmatprep.subr.bf16.mxu0 0
      %1068 = vmatpush1.bf16.msra.mxu0 0
      %1069 = vmatprep.subr.bf16.mxu0 0
      %1070 = vmatpush1.bf16.msra.mxu0 0
      %1071 = vmatprep.subr.bf16.mxu0 0
      %1072 = vmatpush1.bf16.msra.mxu0 0
      %1073 = vmatprep.subr.bf16.mxu0 0
      %1074 = vmatpush1.bf16.msra.mxu0 0
      %1075 = vmatprep.subr.bf16.mxu0 0
      %1076 = vmatpush1.bf16.msra.mxu0 %v1059
      %1077 = vmatprep.subr.bf16.mxu0 0
      %1078 = vmatpush2.bf16.msra.mxu0 0
      %1079 = vmatprep.subr.bf16.mxu0 0
      %1080 = vmatpush2.bf16.msra.mxu0 0
      %1081 = vmatprep.subr.bf16.mxu0 0
      %1082 = vmatpush2.bf16.msra.mxu0 0
      %1083 = vmatprep.subr.bf16.mxu0 0
      %1084 = vmatpush2.bf16.msra.mxu0 0
      %1085 = vmatprep.subr.bf16.mxu0 0
      %1086 = vmatpush2.bf16.msra.mxu0 0
      %1087 = vmatprep.subr.bf16.mxu0 0
      %1088 = vmatpush2.bf16.msra.mxu0 0
      %1089 = vmatprep.subr.bf16.mxu0 0
      %1090 = vmatpush2.bf16.msra.mxu0 0
      %1091 = vmatprep.subr.bf16.mxu0 0
      %1092 = vmatpush2.bf16.msra.mxu0 0
      %1093 = vmatprep.mubr.bf16.mxu0 0
      %1094 = vmatmul.mubr.bf16.gmra.mxu0 %v1056
      %v1095 = vpop.f32.mrf.mxu0
      %v1096 = vadd.f32 0.0, %v1095
      %v1097 = vpop.f32.mrf.mxu0
      %v1098 = vpop.f32.mrf.mxu0
      %v1099 = vpop.f32.mrf.mxu0
      %1100 = vdwg.mxu0
      %1101 = vrot.lane.b32.xlu0 %v862, 112
      %v1102 = vpop.permute.xlu0 %1101
      %1103 = vrot.lane.b32.xlu0 %v862, 80
      %v1104 = vpop.permute.xlu0 %1103
      %v1106 = vsel %vm867, %v1102, 0
      %v1109 = vsel %vm867, %v1104, 0
      %1111 = vmatprep.subr.bf16.mxu0 0
      %1112 = vmatpush1.bf16.xpose.msra.mxu0 0
      %1113 = vmatprep.subr.bf16.mxu0 0
      %1114 = vmatpush1.bf16.xpose.msra.mxu0 0
      %1115 = vmatprep.subr.bf16.mxu0 0
      %1116 = vmatpush1.bf16.xpose.msra.mxu0 0
      %1117 = vmatprep.subr.bf16.mxu0 0
      %1118 = vmatpush1.bf16.xpose.msra.mxu0 0
      %1119 = vmatprep.subr.bf16.mxu0 0
      %1120 = vmatpush1.bf16.xpose.msra.mxu0 0
      %1121 = vmatprep.subr.bf16.mxu0 0
      %1122 = vmatpush1.bf16.xpose.msra.mxu0 0
      %1123 = vmatprep.subr.bf16.mxu0 0
      %1124 = vmatpush1.bf16.xpose.msra.mxu0 0
      %1125 = vmatprep.subr.bf16.mxu0 0
      %1126 = vmatpush1.bf16.xpose.msra.mxu0 %v1109
      %1127 = vmatprep.subr.bf16.mxu0 0
      %1128 = vmatpush2.bf16.xpose.msra.mxu0 0
      %1129 = vmatprep.subr.bf16.mxu0 0
      %1130 = vmatpush2.bf16.xpose.msra.mxu0 0
      %1131 = vmatprep.subr.bf16.mxu0 0
      %1132 = vmatpush2.bf16.xpose.msra.mxu0 0
      %1133 = vmatprep.subr.bf16.mxu0 0
      %1134 = vmatpush2.bf16.xpose.msra.mxu0 0
      %1135 = vmatprep.subr.bf16.mxu0 0
      %1136 = vmatpush2.bf16.xpose.msra.mxu0 0
      %1137 = vmatprep.subr.bf16.mxu0 0
      %1138 = vmatpush2.bf16.xpose.msra.mxu0 0
      %1139 = vmatprep.subr.bf16.mxu0 0
      %1140 = vmatpush2.bf16.xpose.msra.mxu0 0
      %1141 = vmatprep.subr.bf16.mxu0 0
      %1142 = vmatpush2.bf16.xpose.msra.mxu0 0
      %1143 = vmatprep.mubr.bf16.mxu0 0
      %1144 = vmatmul.mubr.bf16.gmra.mxu0 %v1106
      %v1145 = vpop.f32.mrf.mxu0
      %v1146 = vadd.f32 0.0, %v1145
      %v1147 = vpop.f32.mrf.mxu0
      %v1148 = vpop.f32.mrf.mxu0
      %v1149 = vpop.f32.mrf.mxu0
      %1150 = vdwg.mxu0
      %1151 = vrot.lane.b32.xlu0 %v863, 112
      %v1152 = vpop.permute.xlu0 %1151
      %1153 = vrot.lane.b32.xlu0 %v863, 80
      %v1154 = vpop.permute.xlu0 %1153
      %v1156 = vsel %vm867, %v1152, 0
      %v1159 = vsel %vm867, %v1154, 0
      %1161 = vmatprep.subr.bf16.mxu0 0
      %1162 = vmatpush1.bf16.xpose.msra.mxu0 0
      %1163 = vmatprep.subr.bf16.mxu0 0
      %1164 = vmatpush1.bf16.xpose.msra.mxu0 0
      %1165 = vmatprep.subr.bf16.mxu0 0
      %1166 = vmatpush1.bf16.xpose.msra.mxu0 0
      %1167 = vmatprep.subr.bf16.mxu0 0
      %1168 = vmatpush1.bf16.xpose.msra.mxu0 0
      %1169 = vmatprep.subr.bf16.mxu0 0
      %1170 = vmatpush1.bf16.xpose.msra.mxu0 0
      %1171 = vmatprep.subr.bf16.mxu0 0
      %1172 = vmatpush1.bf16.xpose.msra.mxu0 0
      %1173 = vmatprep.subr.bf16.mxu0 0
      %1174 = vmatpush1.bf16.xpose.msra.mxu0 0
      %1175 = vmatprep.subr.bf16.mxu0 0
      %1176 = vmatpush1.bf16.xpose.msra.mxu0 %v1159
      %1177 = vmatprep.subr.bf16.mxu0 0
      %1178 = vmatpush2.bf16.xpose.msra.mxu0 0
      %1179 = vmatprep.subr.bf16.mxu0 0
      %1180 = vmatpush2.bf16.xpose.msra.mxu0 0
      %1181 = vmatprep.subr.bf16.mxu0 0
      %1182 = vmatpush2.bf16.xpose.msra.mxu0 0
      %1183 = vmatprep.subr.bf16.mxu0 0
      %1184 = vmatpush2.bf16.xpose.msra.mxu0 0
      %1185 = vmatprep.subr.bf16.mxu0 0
      %1186 = vmatpush2.bf16.xpose.msra.mxu0 0
      %1187 = vmatprep.subr.bf16.mxu0 0
      %1188 = vmatpush2.bf16.xpose.msra.mxu0 0
      %1189 = vmatprep.subr.bf16.mxu0 0
      %1190 = vmatpush2.bf16.xpose.msra.mxu0 0
      %1191 = vmatprep.subr.bf16.mxu0 0
      %1192 = vmatpush2.bf16.xpose.msra.mxu0 0
      %1193 = vmatprep.mubr.bf16.mxu0 0
      %1194 = vmatmul.mubr.bf16.gmra.mxu0 %v1156
      %v1195 = vpop.f32.mrf.mxu0
      %v1196 = vadd.f32 0.0, %v1195
      %v1197 = vpop.f32.mrf.mxu0
      %v1198 = vpop.f32.mrf.mxu0
      %v1199 = vpop.f32.mrf.mxu0
      %1200 = vdwg.mxu0
      %v1201 = vmul.f32 %v1146, 0.25
      %v1202 = vmul.f32 %v1196, 0.25
      %v1203 = vadd.f32 %v1201, %v970
      %v1204 = vadd.f32 %v1202, %v974
      %v1205 = vsel %vm979, %v1203, -inf
      %1206 = vmax.xlane.f32.xlu0 %v1205
      %v1207 = vpop.xlane.xlu0 %1206
      %v1208 = vsel %vm979, %v1204, -inf
      %1209 = vmax.xlane.f32.xlu0 %v1208
      %v1210 = vpop.xlane.xlu0 %1209
      %v1211 = vsub.f32 %v1203, %v1207
      %v1212 = vsub.f32 %v1204, %v1210
      %v1213 = vmul.f32 %v1211, 1.442695
      %v1214 = vpow.pop %v1213
      %v1215 = vmul.f32 %v1212, 1.442695
      %v1216 = vpow.pop %v1215
      %v1217 = vsel %vm979, %v1214, 0.0
      %1218 = vadd.xlane.f32.xlu0 %v1217
      %v1219 = vpop.xlane.xlu0 %1218
      %v1220 = vsel %vm979, %v1216, 0.0
      %1221 = vadd.xlane.f32.xlu0 %v1220
      %v1222 = vpop.xlane.xlu0 %1221
      %v1223 = vrcp.pop %v1219
      %v1224 = vrcp.pop %v1222
      %v1225 = vmul.f32 %v1214, %v1223
      %v1226 = vmul.f32 %v1216, %v1224
      %v1227 = vpack.c.bf16 %v1225, %v1225
      %v1228 = vpack.c.bf16 %v1226, %v1226
      %1229 = vrot.lane.b32.xlu0 %v862, 48
      %v1230 = vpop.permute.xlu0 %1229
      %v1232 = vsel %vm979, %v1227, 0
      %v1235 = vsel %vm1009, %v1230, 0
      %1237 = vmatprep.subr.bf16.mxu0 0
      %1238 = vmatpush1.bf16.msra.mxu0 0
      %1239 = vmatprep.subr.bf16.mxu0 0
      %1240 = vmatpush1.bf16.msra.mxu0 0
      %1241 = vmatprep.subr.bf16.mxu0 0
      %1242 = vmatpush1.bf16.msra.mxu0 0
      %1243 = vmatprep.subr.bf16.mxu0 0
      %1244 = vmatpush1.bf16.msra.mxu0 0
      %1245 = vmatprep.subr.bf16.mxu0 0
      %1246 = vmatpush1.bf16.msra.mxu0 0
      %1247 = vmatprep.subr.bf16.mxu0 0
      %1248 = vmatpush1.bf16.msra.mxu0 0
      %1249 = vmatprep.subr.bf16.mxu0 0
      %1250 = vmatpush1.bf16.msra.mxu0 0
      %1251 = vmatprep.subr.bf16.mxu0 0
      %1252 = vmatpush1.bf16.msra.mxu0 %v1235
      %1253 = vmatprep.subr.bf16.mxu0 0
      %1254 = vmatpush2.bf16.msra.mxu0 0
      %1255 = vmatprep.subr.bf16.mxu0 0
      %1256 = vmatpush2.bf16.msra.mxu0 0
      %1257 = vmatprep.subr.bf16.mxu0 0
      %1258 = vmatpush2.bf16.msra.mxu0 0
      %1259 = vmatprep.subr.bf16.mxu0 0
      %1260 = vmatpush2.bf16.msra.mxu0 0
      %1261 = vmatprep.subr.bf16.mxu0 0
      %1262 = vmatpush2.bf16.msra.mxu0 0
      %1263 = vmatprep.subr.bf16.mxu0 0
      %1264 = vmatpush2.bf16.msra.mxu0 0
      %1265 = vmatprep.subr.bf16.mxu0 0
      %1266 = vmatpush2.bf16.msra.mxu0 0
      %1267 = vmatprep.subr.bf16.mxu0 0
      %1268 = vmatpush2.bf16.msra.mxu0 0
      %1269 = vmatprep.mubr.bf16.mxu0 0
      %1270 = vmatmul.mubr.bf16.gmra.mxu0 %v1232
      %v1271 = vpop.f32.mrf.mxu0
      %v1272 = vadd.f32 0.0, %v1271
      %v1273 = vpop.f32.mrf.mxu0
      %v1274 = vpop.f32.mrf.mxu0
      %v1275 = vpop.f32.mrf.mxu0
      %1276 = vdwg.mxu0
      %1277 = vrot.lane.b32.xlu0 %v863, 48
      %v1278 = vpop.permute.xlu0 %1277
      %v1280 = vsel %vm979, %v1228, 0
      %v1283 = vsel %vm1009, %v1278, 0
      %1285 = vmatprep.subr.bf16.mxu0 0
      %1286 = vmatpush1.bf16.msra.mxu0 0
      %1287 = vmatprep.subr.bf16.mxu0 0
      %1288 = vmatpush1.bf16.msra.mxu0 0
      %1289 = vmatprep.subr.bf16.mxu0 0
      %1290 = vmatpush1.bf16.msra.mxu0 0
      %1291 = vmatprep.subr.bf16.mxu0 0
      %1292 = vmatpush1.bf16.msra.mxu0 0
      %1293 = vmatprep.subr.bf16.mxu0 0
      %1294 = vmatpush1.bf16.msra.mxu0 0
      %1295 = vmatprep.subr.bf16.mxu0 0
      %1296 = vmatpush1.bf16.msra.mxu0 0
      %1297 = vmatprep.subr.bf16.mxu0 0
      %1298 = vmatpush1.bf16.msra.mxu0 0
      %1299 = vmatprep.subr.bf16.mxu0 0
      %1300 = vmatpush1.bf16.msra.mxu0 %v1283
      %1301 = vmatprep.subr.bf16.mxu0 0
      %1302 = vmatpush2.bf16.msra.mxu0 0
      %1303 = vmatprep.subr.bf16.mxu0 0
      %1304 = vmatpush2.bf16.msra.mxu0 0
      %1305 = vmatprep.subr.bf16.mxu0 0
      %1306 = vmatpush2.bf16.msra.mxu0 0
      %1307 = vmatprep.subr.bf16.mxu0 0
      %1308 = vmatpush2.bf16.msra.mxu0 0
      %1309 = vmatprep.subr.bf16.mxu0 0
      %1310 = vmatpush2.bf16.msra.mxu0 0
      %1311 = vmatprep.subr.bf16.mxu0 0
      %1312 = vmatpush2.bf16.msra.mxu0 0
      %1313 = vmatprep.subr.bf16.mxu0 0
      %1314 = vmatpush2.bf16.msra.mxu0 0
      %1315 = vmatprep.subr.bf16.mxu0 0
      %1316 = vmatpush2.bf16.msra.mxu0 0
      %1317 = vmatprep.mubr.bf16.mxu0 0
      %1318 = vmatmul.mubr.bf16.gmra.mxu0 %v1280
      %v1319 = vpop.f32.mrf.mxu0
      %v1320 = vadd.f32 0.0, %v1319
      %v1321 = vpop.f32.mrf.mxu0
      %v1322 = vpop.f32.mrf.mxu0
      %v1323 = vpop.f32.mrf.mxu0
      %1324 = vdwg.mxu0
      %1327 = vrot.lane.b32.xlu0 %v1272, 16
      %v1328 = vpop.permute.xlu0 %1327
      %1329 = vrot.lane.b32.xlu0 %v1320, 16
      %v1330 = vpop.permute.xlu0 %1329
      %v1333 = vsel %vm867, %v1048, %v1328
      %v1334 = vsel %vm867, %v1096, %v1330
      %v1335 = vpack.c.bf16 %v1334, %v1333
      %v1336 = vld [vmem:[%s690] sm:$0xf]
      %v1337 = vld [vmem:[%s690 + $0x4] sm:$0xf]
      %v1338 = vld [vmem:[%s690 + $0x8] sm:$0xf]
      %v1339 = vld [vmem:[%s690 + $0xc] sm:$0xf]
      %v1340 = vlaneseq
      %v1341 = vshrl.u32 %v1340, 7
      %v1342 = vsub.s32 0, %v1341
      %v1343 = vrot.slane %v792, %v1342
      %v1348 = vunpack.c.l.b16 %v1336
      %v1349 = vunpack.c.l.b16 %v1337
      %v1350 = vunpack.c.l.b16 %v1338
      %v1351 = vunpack.c.l.b16 %v1339
      %v1352 = vpack.c.b16 %v1349, %v1348
      %v1353 = vpack.c.b16 %v1351, %v1350
      %v1357 = vsel %vm817, %v1335, 0
      %1359 = vmatprep.subr.bf16.mxu0 0
      %1360 = vmatpush1.bf16.msra.mxu0 0
      %1361 = vmatprep.subr.bf16.mxu0 0
      %1362 = vmatpush1.bf16.msra.mxu0 0
      %1363 = vmatprep.subr.bf16.mxu0 0
      %1364 = vmatpush1.bf16.msra.mxu0 0
      %1365 = vmatprep.subr.bf16.mxu0 0
      %1366 = vmatpush1.bf16.msra.mxu0 0
      %1367 = vmatprep.subr.bf16.mxu0 0
      %1368 = vmatpush1.bf16.msra.mxu0 0
      %1369 = vmatprep.subr.bf16.mxu0 0
      %1370 = vmatpush1.bf16.msra.mxu0 0
      %1371 = vmatprep.subr.bf16.mxu0 0
      %1372 = vmatpush1.bf16.msra.mxu0 %v1353
      %1373 = vmatprep.subr.bf16.mxu0 0
      %1374 = vmatpush1.bf16.msra.mxu0 %v1352
      %1375 = vmatprep.subr.bf16.mxu0 0
      %1376 = vmatpush2.bf16.msra.mxu0 0
      %1377 = vmatprep.subr.bf16.mxu0 0
      %1378 = vmatpush2.bf16.msra.mxu0 0
      %1379 = vmatprep.subr.bf16.mxu0 0
      %1380 = vmatpush2.bf16.msra.mxu0 0
      %1381 = vmatprep.subr.bf16.mxu0 0
      %1382 = vmatpush2.bf16.msra.mxu0 0
      %1383 = vmatprep.subr.bf16.mxu0 0
      %1384 = vmatpush2.bf16.msra.mxu0 0
      %1385 = vmatprep.subr.bf16.mxu0 0
      %1386 = vmatpush2.bf16.msra.mxu0 0
      %1387 = vmatprep.subr.bf16.mxu0 0
      %1388 = vmatpush2.bf16.msra.mxu0 0
      %1389 = vmatprep.subr.bf16.mxu0 0
      %1390 = vmatpush2.bf16.msra.mxu0 0
      %1391 = vmatprep.mubr.bf16.mxu0 0
      %1392 = vmatmul.mubr.bf16.gmra.mxu0 %v1357
      %v1393 = vpop.f32.mrf.mxu0
      %v1394 = vadd.f32 %v1343, %v1393
      %v1395 = vpop.f32.mrf.mxu0
      %v1396 = vpop.f32.mrf.mxu0
      %v1397 = vadd.f32 %v1343, %v1396
      %v1398 = vpop.f32.mrf.mxu0
      %1399 = vdwg.mxu0
      %v1400 = vadd.f32 %v788, %v1394
      %v1401 = vadd.f32 %v789, %v1397
      %v1402 = vsel %vm817, %v1400, 0.0
      %1403 = vadd.xlane.f32.xlu0 %v1402
      %v1404 = vpop.xlane.xlu0 %1403
      %v1405 = vsel %vm817, %v1401, 0.0
      %1406 = vadd.xlane.f32.xlu0 %v1405
      %v1407 = vpop.xlane.xlu0 %1406
      %v1408 = vrcp.pop 32.0
      %v1409 = vmul.f32 %v1404, %v1408
      %v1410 = vmul.f32 %v1407, %v1408
      %v1411 = vsub.f32 %v1400, %v1409
      %v1412 = vsub.f32 %v1401, %v1410
      %v1413 = vmul.f32 %v1411, %v1411
      %v1414 = vmul.f32 %v1412, %v1412
      %v1415 = vsel %vm817, %v1413, 0.0
      %1416 = vadd.xlane.f32.xlu0 %v1415
      %v1417 = vpop.xlane.xlu0 %1416
      %v1418 = vsel %vm817, %v1414, 0.0
      %1419 = vadd.xlane.f32.xlu0 %v1418
      %v1420 = vpop.xlane.xlu0 %1419
      %v1421 = vmul.f32 %v1417, %v1408
      %v1422 = vmul.f32 %v1420, %v1408
      %v1423 = vadd.f32 %v1421, 1e-12
      %v1424 = vadd.f32 %v1422, 1e-12
      %v1425 = vrsqrt.pop %v1423
      %v1426 = vrsqrt.pop %v1424
      %v1427 = vmul.f32 %v1411, %v1425
      %v1428 = vmul.f32 %v1412, %v1426
      %v1429 = vlaneseq
      %v1430 = vshrl.u32 %v1429, 7
      %v1431 = vsub.s32 1, %v1430
      %v1432 = vrot.slane %v792, %v1431
      %v1433 = vmul.f32 %v1427, %v1432
      %v1434 = vmul.f32 %v1428, %v1432
      %v1435 = vlaneseq
      %v1436 = vshrl.u32 %v1435, 7
      %v1437 = vsub.s32 2, %v1436
      %v1438 = vrot.slane %v792, %v1437
      %v1439 = vadd.f32 %v1433, %v1438
      %v1440 = vadd.f32 %v1434, %v1438
      %v1441 = vpack.c.bf16 %v1440, %v1439
      %v1442 = vld [vmem:[%s701] sm:$0xf]
      %v1443 = vld [vmem:[%s701 + $0x4] sm:$0xf]
      %v1444 = vld [vmem:[%s701 + $0x8] sm:$0xf]
      %v1445 = vld [vmem:[%s701 + $0xc] sm:$0xf]
      %v1446 = vld [vmem:[%s710] sm:$0x1]
      %v1448 = vlaneseq
      %v1449 = vshrl.u32 %v1448, 7
      %v1450 = vsub.s32 0, %v1449
      %v1451 = vrot.slane %v1446, %v1450
      %v1457 = vunpack.c.l.b16 %v1442
      %v1458 = vunpack.c.l.b16 %v1443
      %v1459 = vunpack.c.l.b16 %v1444
      %v1460 = vunpack.c.l.b16 %v1445
      %v1461 = vpack.c.b16 %v1458, %v1457
      %v1462 = vpack.c.b16 %v1460, %v1459
      %v1466 = vsel %vm817, %v1441, 0
      %1468 = vmatprep.subr.bf16.mxu0 0
      %1469 = vmatpush1.bf16.msra.mxu0 0
      %1470 = vmatprep.subr.bf16.mxu0 0
      %1471 = vmatpush1.bf16.msra.mxu0 0
      %1472 = vmatprep.subr.bf16.mxu0 0
      %1473 = vmatpush1.bf16.msra.mxu0 0
      %1474 = vmatprep.subr.bf16.mxu0 0
      %1475 = vmatpush1.bf16.msra.mxu0 0
      %1476 = vmatprep.subr.bf16.mxu0 0
      %1477 = vmatpush1.bf16.msra.mxu0 0
      %1478 = vmatprep.subr.bf16.mxu0 0
      %1479 = vmatpush1.bf16.msra.mxu0 0
      %1480 = vmatprep.subr.bf16.mxu0 0
      %1481 = vmatpush1.bf16.msra.mxu0 %v1462
      %1482 = vmatprep.subr.bf16.mxu0 0
      %1483 = vmatpush1.bf16.msra.mxu0 %v1461
      %1484 = vmatprep.subr.bf16.mxu0 0
      %1485 = vmatpush2.bf16.msra.mxu0 0
      %1486 = vmatprep.subr.bf16.mxu0 0
      %1487 = vmatpush2.bf16.msra.mxu0 0
      %1488 = vmatprep.subr.bf16.mxu0 0
      %1489 = vmatpush2.bf16.msra.mxu0 0
      %1490 = vmatprep.subr.bf16.mxu0 0
      %1491 = vmatpush2.bf16.msra.mxu0 0
      %1492 = vmatprep.subr.bf16.mxu0 0
      %1493 = vmatpush2.bf16.msra.mxu0 0
      %1494 = vmatprep.subr.bf16.mxu0 0
      %1495 = vmatpush2.bf16.msra.mxu0 0
      %1496 = vmatprep.subr.bf16.mxu0 0
      %1497 = vmatpush2.bf16.msra.mxu0 0
      %1498 = vmatprep.subr.bf16.mxu0 0
      %1499 = vmatpush2.bf16.msra.mxu0 0
      %1500 = vmatprep.mubr.bf16.mxu0 0
      %1501 = vmatmul.mubr.bf16.gmra.mxu0 %v1466
      %v1502 = vpop.f32.mrf.mxu0
      %v1503 = vadd.f32 %v1451, %v1502
      %v1504 = vpop.f32.mrf.mxu0
      %v1505 = vpop.f32.mrf.mxu0
      %v1506 = vadd.f32 %v1451, %v1505
      %v1507 = vpop.f32.mrf.mxu0
      %1508 = vdwg.mxu0
      %v1509 = vmul.f32 %v1503, %v1503
      %v1510 = vmul.f32 %v1506, %v1506
      %v1511 = vmul.f32 %v1503, %v1509
      %v1512 = vmul.f32 %v1506, %v1510
      %v1513 = vmul.f32 %v1511, 0.044715
      %v1514 = vmul.f32 %v1512, 0.044715
      %v1515 = vadd.f32 %v1503, %v1513
      %v1516 = vadd.f32 %v1506, %v1514
      %v1517 = vmul.f32 %v1515, 0.7978846
      %v1518 = vmul.f32 %v1516, 0.7978846
      %v1519 = vtanh.pop %v1517
      %v1520 = vtanh.pop %v1518
      %v1521 = vadd.f32 %v1519, 1.0
      %v1522 = vadd.f32 %v1520, 1.0
      %v1523 = vmul.f32 %v1521, 0.5
      %v1524 = vmul.f32 %v1522, 0.5
      %v1525 = vmul.f32 %v1503, %v1523
      %v1526 = vmul.f32 %v1506, %v1524
      %v1527 = vpack.c.bf16 %v1526, %v1525
      %v1528 = vld [vmem:[%s721] sm:$0xf]
      %v1529 = vld [vmem:[%s721 + $0x4] sm:$0xf]
      %v1530 = vld [vmem:[%s721 + $0x8] sm:$0xf]
      %v1531 = vld [vmem:[%s721 + $0xc] sm:$0xf]
      %v1532 = vld [vmem:[%s721 + $0x10] sm:$0xf]
      %v1533 = vld [vmem:[%s721 + $0x14] sm:$0xf]
      %v1534 = vld [vmem:[%s721 + $0x18] sm:$0xf]
      %v1535 = vld [vmem:[%s721 + $0x1c] sm:$0xf]
      %v1536 = vlaneseq
      %v1537 = vshrl.u32 %v1536, 7
      %v1538 = vsub.s32 3, %v1537
      %v1539 = vrot.slane %v792, %v1538
      %v1548 = vunpack.c.l.b16 %v1528
      %v1549 = vunpack.c.l.b16 %v1529
      %v1550 = vunpack.c.l.b16 %v1530
      %v1551 = vunpack.c.l.b16 %v1531
      %v1552 = vunpack.c.l.b16 %v1532
      %v1553 = vunpack.c.l.b16 %v1533
      %v1554 = vunpack.c.l.b16 %v1534
      %v1555 = vunpack.c.l.b16 %v1535
      %v1556 = vpack.c.b16 %v1549, %v1548
      %v1557 = vpack.c.b16 %v1551, %v1550
      %v1558 = vpack.c.b16 %v1553, %v1552
      %v1559 = vpack.c.b16 %v1555, %v1554
      %vm1564 = vcmask 523264
      %v1566 = vsel %vm1564, %v1527, 0
      %1568 = vmatprep.subr.bf16.mxu0 0
      %1569 = vmatpush1.bf16.msra.mxu0 0
      %1570 = vmatprep.subr.bf16.mxu0 0
      %1571 = vmatpush1.bf16.msra.mxu0 0
      %1572 = vmatprep.subr.bf16.mxu0 0
      %1573 = vmatpush1.bf16.msra.mxu0 0
      %1574 = vmatprep.subr.bf16.mxu0 0
      %1575 = vmatpush1.bf16.msra.mxu0 0
      %1576 = vmatprep.subr.bf16.mxu0 0
      %1577 = vmatpush1.bf16.msra.mxu0 %v1559
      %1578 = vmatprep.subr.bf16.mxu0 0
      %1579 = vmatpush1.bf16.msra.mxu0 %v1558
      %1580 = vmatprep.subr.bf16.mxu0 0
      %1581 = vmatpush1.bf16.msra.mxu0 %v1557
      %1582 = vmatprep.subr.bf16.mxu0 0
      %1583 = vmatpush1.bf16.msra.mxu0 %v1556
      %1584 = vmatprep.subr.bf16.mxu0 0
      %1585 = vmatpush2.bf16.msra.mxu0 0
      %1586 = vmatprep.subr.bf16.mxu0 0
      %1587 = vmatpush2.bf16.msra.mxu0 0
      %1588 = vmatprep.subr.bf16.mxu0 0
      %1589 = vmatpush2.bf16.msra.mxu0 0
      %1590 = vmatprep.subr.bf16.mxu0 0
      %1591 = vmatpush2.bf16.msra.mxu0 0
      %1592 = vmatprep.subr.bf16.mxu0 0
      %1593 = vmatpush2.bf16.msra.mxu0 0
      %1594 = vmatprep.subr.bf16.mxu0 0
      %1595 = vmatpush2.bf16.msra.mxu0 0
      %1596 = vmatprep.subr.bf16.mxu0 0
      %1597 = vmatpush2.bf16.msra.mxu0 0
      %1598 = vmatprep.subr.bf16.mxu0 0
      %1599 = vmatpush2.bf16.msra.mxu0 0
      %1600 = vmatprep.mubr.bf16.mxu0 0
      %1601 = vmatmul.mubr.bf16.gmra.mxu0 %v1566
      %v1602 = vpop.f32.mrf.mxu0
      %v1603 = vadd.f32 %v1539, %v1602
      %v1604 = vpop.f32.mrf.mxu0
      %v1605 = vpop.f32.mrf.mxu0
      %v1606 = vadd.f32 %v1539, %v1605
      %v1607 = vpop.f32.mrf.mxu0
      %1608 = vdwg.mxu0
      %v1609 = vadd.f32 %v1439, %v1603
      %v1610 = vadd.f32 %v1440, %v1606
      %v1611 = vsel %vm817, %v1609, 0.0
      %1612 = vadd.xlane.f32.xlu0 %v1611
      %v1613 = vpop.xlane.xlu0 %1612
      %v1614 = vsel %vm817, %v1610, 0.0
      %1615 = vadd.xlane.f32.xlu0 %v1614
      %v1616 = vpop.xlane.xlu0 %1615
      %v1617 = vmul.f32 %v1613, %v1408
      %v1618 = vmul.f32 %v1616, %v1408
      %v1619 = vsub.f32 %v1609, %v1617
      %v1620 = vsub.f32 %v1610, %v1618
      %v1621 = vmul.f32 %v1619, %v1619
      %v1622 = vmul.f32 %v1620, %v1620
      %v1623 = vsel %vm817, %v1621, 0.0
      %1624 = vadd.xlane.f32.xlu0 %v1623
      %v1625 = vpop.xlane.xlu0 %1624
      %v1626 = vsel %vm817, %v1622, 0.0
      %1627 = vadd.xlane.f32.xlu0 %v1626
      %v1628 = vpop.xlane.xlu0 %1627
      %v1629 = vmul.f32 %v1625, %v1408
      %v1630 = vmul.f32 %v1628, %v1408
      %v1631 = vadd.f32 %v1629, 1e-12
      %v1632 = vadd.f32 %v1630, 1e-12
      %v1633 = vrsqrt.pop %v1631
      %v1634 = vrsqrt.pop %v1632
      %v1635 = vmul.f32 %v1619, %v1633
      %v1636 = vmul.f32 %v1620, %v1634
      %v1637 = vlaneseq
      %v1638 = vshrl.u32 %v1637, 7
      %v1639 = vsub.s32 4, %v1638
      %v1640 = vrot.slane %v792, %v1639
      %v1641 = vmul.f32 %v1635, %v1640
      %v1642 = vmul.f32 %v1636, %v1640
      %v1643 = vlaneseq
      %v1644 = vshrl.u32 %v1643, 7
      %v1645 = vsub.s32 5, %v1644
      %v1646 = vrot.slane %v792, %v1645
      %v1647 = vadd.f32 %v1641, %v1646
      %v1648 = vadd.f32 %v1642, %v1646
      %1649 = vst.msk [vmem:[#allocation2] sm:$0xff] %vm817, %v1647
      %1650 = vst.msk [vmem:[#allocation2 + $0x8] sm:$0xff] %vm817, %v1648
      %p1651 = scmp.eq.s32.totalorder %s34, 1
      // Predicated region
      $region69: #{custom_bert_forward.1} parent=63 // pred_check
        %p1652 = pneg %p1651
      $region70: #{custom_bert_forward.1} parent=63 // pred_check_branch
        %1654 = sbr.rel (%p1652) target = $region72
      $region71: #{custom_bert_forward.1} parent=63 // pred_region
        %v1655 = vld [vmem:[%s654] sm:$0xff]
        %v1656 = vld [vmem:[%s654 + $0x8] sm:$0xff]
        %1658 = vset.pattern.permute.xlu0 0
        %1659 = vperm.xlu0 %1658, %v1655
        %v1660 = vpop.permute.xlu0 %1659
        %1663 = vset.pattern.permute.xlu0 0
        %1664 = vperm.xlu0 %1663, %v1656
        %v1665 = vpop.permute.xlu0 %1664
        %v1667 = vmul.f32 %v1647, %v1660
        %v1668 = vmul.f32 %v1648, %v1665
        %v1669 = vsel %vm817, %v1667, 0.0
        %v1670 = vrot.slane %v1669, 4
        %v1671 = vadd.f32 %v1669, %v1670
        %v1672 = vrot.slane %v1671, 2
        %v1673 = vadd.f32 %v1671, %v1672
        %v1674 = vrot.slane %v1673, 1
        %v1675 = vadd.f32 %v1673, %v1674
        %v1676 = vsel %vm817, %v1668, 0.0
        %v1677 = vrot.slane %v1676, 4
        %v1678 = vadd.f32 %v1676, %v1677
        %v1679 = vrot.slane %v1678, 2
        %v1680 = vadd.f32 %v1678, %v1679
        %v1681 = vrot.slane %v1680, 1
        %v1682 = vadd.f32 %v1680, %v1681
        %vm1683 = vcmask 7168
        %v1684 = vsel %vm1683, %v1655, 0.0
        %v1685 = vrot.slane %v1684, 4
        %v1686 = vadd.f32 %v1684, %v1685
        %v1687 = vrot.slane %v1686, 2
        %v1688 = vadd.f32 %v1686, %v1687
        %v1689 = vrot.slane %v1688, 1
        %v1690 = vadd.f32 %v1688, %v1689
        %v1691 = vsel %vm1683, %v1656, 0.0
        %v1692 = vrot.slane %v1691, 4
        %v1693 = vadd.f32 %v1691, %v1692
        %v1694 = vrot.slane %v1693, 2
        %v1695 = vadd.f32 %v1693, %v1694
        %v1696 = vrot.slane %v1695, 1
        %v1697 = vadd.f32 %v1695, %v1696
        %v1698 = vmax.f32 %v1690, 0.0001
        %v1699 = vmax.f32 %v1697, 0.0001
        %v1700 = vrcp.pop %v1698
        %v1701 = vrcp.pop %v1699
        %1703 = vset.pattern.permute.xlu0 0
        %1704 = vperm.xlu0 %1703, %v1700
        %v1705 = vpop.permute.xlu0 %1704
        %1708 = vset.pattern.permute.xlu0 0
        %1709 = vperm.xlu0 %1708, %v1701
        %v1710 = vpop.permute.xlu0 %1709
        %v1712 = vmul.f32 %v1675, %v1705
        %v1713 = vmul.f32 %v1682, %v1710
        %v1714 = vmul.f32 %v1712, %v1712
        %v1715 = vmul.f32 %v1713, %v1713
        %vm1718 = vcmask 1041409
        %v1719 = vsel %vm1718, %v1715, %v1714
        %vm1721 = vcmask 254976
        %v1722 = vsel %vm1721, %v1719, 0.0
        %1723 = vadd.xlane.f32.xlu0 %v1722
        %v1724 = vpop.xlane.xlu0 %1723
        %v1725 = vmax.f32 %v1724, 1e-24
        %v1726 = vrsqrt.pop %v1725
        %v1728 = vrot.slane %v1726, 1
        %v1731 = vmul.f32 %v1712, %v1726
        %v1732 = vmul.f32 %v1713, %v1728
        %v1735 = vrot.slane %v1732, 7
        %v1736 = vsel %vm1718, %v1735, %v1731
        %1738 = vst.msk [vmem:[%s736] sm:$0x3] %vm1721, %v1736
      $region72: #{custom_bert_forward.1} parent=63 // pred_fallthru
        _
      %p1739 = scmp.lt.s32.totalorder %s33, 2
      %s1740 = scalar_select %p1739, %s33, 2
      %s1741 = smul.addr %s1740, 2
      %s1742 = scalar_lea.vmem %s12, %s1741
      // Predicated region
      $region73: #{custom_bert_forward.1} parent=63 // pred_check
        %p1743 = pneg %p375
      $region74: #{custom_bert_forward.1} parent=63 // pred_check_branch
        %1745 = sbr.rel (%p1743) target = $region76
      $region75: #{custom_bert_forward.1} parent=63 // pred_region
        _
      $region76: #{custom_bert_forward.1} parent=63 // pred_fallthru
        _
    $region64: #{custom_bert_forward.1} parent=5 // pred_fallthru
      _
    %p1746 = scmp.le.s32.totalorder 2, %s24
    // Predicated region
    $region77: #{custom_bert_forward.1} parent=5 // pred_check
      %p1747 = pneg %p1746
    $region78: #{custom_bert_forward.1} parent=5 // pred_check_branch
      %1749 = sbr.rel (%p1747) target = $region80
    $region79: #{custom_bert_forward.1} parent=5 // pred_region
      %s1750 = ssub.s32 %s24, 2
      // Predicated region
      $region81: #{custom_bert_forward.1} parent=79 // pred_check
        %p1751 = pneg %p381
      $region82: #{custom_bert_forward.1} parent=79 // pred_check_branch
        %1753 = sbr.rel (%p1751) target = $region84
      $region83: #{custom_bert_forward.1} parent=79 // pred_region
        %p1754 = scmp.lt.s32.totalorder %s35, 2
        %s1755 = scalar_select %p1754, %s35, 2
        %s1756 = smul.addr %s1755, 2
        %s1757 = scalar_lea.vmem %s12, %s1756
      $region84: #{custom_bert_forward.1} parent=79 // pred_fallthru
        _
    $region80: #{custom_bert_forward.1} parent=5 // pred_fallthru
      _
  $region6: #{custom_bert_forward.1} parent=0 // loop_footer
    %s28 = sadd.s32 1, %s24
  $region7: #{custom_bert_forward.1} parent=0 // loop_footer_branch
    %23 = sbr.rel target = $region3
  $region8: #{custom_bert_forward.1} parent=0 // loop_exit
    _

</llo_original>
